<compile_context>
chip_gen: v7x
topology: tpu7x:2x2x1
jax: 0.10.0
libtpu: 0.0.40
codegen_flags: <defaults>
</compile_context>

<pallas_src>
import functools

import numpy as np
import jax
import jax.numpy as jnp
from jax.experimental import pallas as pl
from jax.experimental.pallas import tpu as pltpu


# ----------------------------------------------------------------------------
# Gaussian "distance" kernel (static hyper-params; a buffer, not a weight).
# ----------------------------------------------------------------------------
def gaussian_kernel_np(kernel_size, sigma):
    kh, kw = kernel_size
    hs = np.arange(kh) - kh // 2
    ws = np.arange(kw) - kw // 2
    hh, ww = np.meshgrid(hs, ws, indexing="ij")
    pdist = hh.astype(np.float64) ** 2 + ww.astype(np.float64) ** 2
    g = np.exp(-pdist / (2.0 * sigma ** 2))
    g = g / g.sum()
    return g.astype(np.float32)


def _round_up(x, m):
    return ((x + m - 1) // m) * m


def _pick_row_tile(H, row_tile):
    """Largest multiple-of-8 divisor of H that is <= row_tile (else the
    smallest such divisor; else H itself when H is not a multiple of 8)."""
    divs = [d for d in range(8, H + 1, 8) if H % d == 0]
    if not divs:
        return H
    le = [d for d in divs if d <= row_tile]
    return max(le) if le else min(divs)


# ----------------------------------------------------------------------------
# Shared selection + voting logic for the pure-JAX reference.
# ----------------------------------------------------------------------------
def _select_and_vote(dist_list, label_list, k, num_classes, cutoff):
    """k smallest distances via streaming insertion (stable on ties -> earlier
    neighbour wins), distance cutoff to the dummy class, then an O(k^2)
    pairwise vote over real classes (largest count wins, smallest class id on
    ties, all-dummy -> class 0)."""
    K = len(dist_list)
    assert K >= k
    shape = dist_list[0].shape
    inf = jnp.float32(jnp.inf)

    best_d = [jnp.full(shape, inf, jnp.float32) for _ in range(k)]
    best_l = [jnp.zeros(shape, jnp.int32) for _ in range(k)]
    for j in range(K):
        d, l = dist_list[j], label_list[j]
        for i in range(k):
            take = d < best_d[i]
            new_d = jnp.where(take, d, best_d[i])
            new_l = jnp.where(take, l, best_l[i])
            if i + 1 < k:
                d = jnp.where(take, best_d[i], d)
                l = jnp.where(take, best_l[i], l)
            best_d[i], best_l[i] = new_d, new_l

    dummy = jnp.int32(num_classes)
    if cutoff > 0:
        best_l = [jnp.where(d > jnp.float32(cutoff), dummy, l)
                  for d, l in zip(best_d, best_l)]

    eq = {}
    for i in range(k):
        for j in range(i + 1, k):
            eq[(i, j)] = (best_l[i] == best_l[j]).astype(jnp.int32)
    big = jnp.int32(num_classes + 1)
    best_score = jnp.full(shape, -1, jnp.int32)
    winner = jnp.zeros(shape, jnp.int32)
    for i in range(k):
        cnt = jnp.ones(shape, jnp.int32)
        for j in range(k):
            if j != i:
                cnt = cnt + eq[(min(i, j), max(i, j))]
        score = jnp.where(best_l[i] == dummy, jnp.int32(-1), cnt * big - best_l[i])
        better = score > best_score
        winner = jnp.where(better, best_l[i], winner)
        best_score = jnp.where(better, score, best_score)
    return winner


# ----------------------------------------------------------------------------
# Pallas kernel: one (batch, row-tile) pair per grid step.
#
# Layouts (all widths are the lane-dense Wd, a multiple of 128, >= W + pw):
#   depth block : (1, H + 4*ph, Wd), rows zero-padded 2*ph top/bottom,
#                 columns [W, Wd) zero.
#   label block : (1, H + 2*ph, Wd), rows zero-padded ph top/bottom,
#                 columns [W, Wd) zero.
#   output block: (1, TH, Wd); columns [W, Wd) are garbage, sliced off outside.
# ----------------------------------------------------------------------------
def _knn2d_kernel(dpad_ref, lpad_ref, out_ref, *, TH, H, W, Wd, kh, kw, k,
                  num_classes, cutoff, weights, ph, pw):
    THe = TH + 2 * ph          # jump / label rows this tile touches (out + halo)
    THd = TH + 4 * ph          # double-padded depth rows this tile touches

    t = pl.program_id(1)
    r0 = pl.multiple_of(t * TH, TH)            # output-row offset of this tile

    inf = jnp.float32(jnp.inf)

    # ---- one aligned load per input, per tile --------------------------------
    dsrc = dpad_ref[0, pl.ds(r0, THd), :]      # (THd, Wd) raw depth (0 in padding)
    lsrc = lpad_ref[0, pl.ds(r0, THe), :]      # (THe, Wd) labels    (0 in padding)

    # Invalid-depth masking hoisted to ONE select per tile (neighbours only —
    # the anchor stays raw, matching the PyTorch module).
    d_inf = jnp.where(dsrc < 0.0, inf, dsrc)
    anchor = dsrc[ph:ph + THe, :]              # raw anchor depth, never inf-masked

    # interior == anchor pixel lies inside the original image; expresses the
    # conv's zero padding of `jump` AND masks the lane-padding columns.
    row_ids = r0 + jax.lax.broadcasted_iota(jnp.int32, (THe, Wd), 0)
    col_ids = jax.lax.broadcasted_iota(jnp.int32, (THe, Wd), 1)
    interior = (row_ids >= ph) & (row_ids < H + ph) & (col_ids < W)

    # Column shifts as XLU lane rotations.  pltpu.roll follows jnp.roll
    # semantics: roll(x, s)[c] = x[(c - s) % Wd]; we want x[(c + off) % Wd].
    # Wrap-around only ever reads the zero-padded columns [W, Wd) because
    # Wd >= W + pw (checked in the wrapper).
    def shift_cols(x, off):
        return x if off == 0 else pltpu.roll(x, (-off) % Wd, axis=1)

    droll = [shift_cols(d_inf, dw - pw) for dw in range(kw)]   # neighbour depth cols
    lroll = [shift_cols(lsrc, dw - pw) for dw in range(kw)]    # neighbour label cols

    # ---- fused neighbour loop: distance conv + streaming top-k insertion ----
    best_d = [jnp.full((TH, Wd), inf, jnp.float32) for _ in range(k)]
    best_l = [jnp.zeros((TH, Wd), jnp.int32) for _ in range(k)]

    for dh in range(kh):
        for dw in range(kw):
            nd = droll[dw][dh:dh + THe, :]                        # (THe, Wd)
            # Select (not a 0/1 multiply): 0 * inf would be NaN for border
            # pixels whose out-of-image anchor has an invalid (inf) neighbour.
            jump = jnp.where(interior, jnp.abs(nd - anchor), 0.0)
            jroll = [shift_cols(jump, dw2 - pw) for dw2 in range(kw)]

            # Depthwise 2-D cross-correlation with the (1 - gaussian) kernel;
            # only cheap static sublane slices inside the tap loop.
            acc = jnp.zeros((TH, Wd), jnp.float32)
            widx = 0
            for dh2 in range(kh):
                for dw2 in range(kw):
                    acc = acc + weights[widx] * jroll[dw2][dh2:dh2 + TH, :]
                    widx += 1

            lab = lroll[dw][dh:dh + TH, :]                        # (TH, Wd)

            # Streaming insertion into the k running (dist, label) pairs.
            # Strict '<' => earlier neighbour keeps its slot on ties (same as
            # the reference's iterative min-extraction).
            d, l = acc, lab
            for i in range(k):
                take = d < best_d[i]
                new_d = jnp.where(take, d, best_d[i])
                new_l = jnp.where(take, l, best_l[i])
                if i + 1 < k:                  # displaced entry keeps sinking
                    d = jnp.where(take, best_d[i], d)
                    l = jnp.where(take, best_l[i], l)
                best_d[i], best_l[i] = new_d, new_l

    # ---- distance cutoff: too-far neighbours vote for the dummy class -------
    dummy = jnp.int32(num_classes)
    if cutoff > 0:
        best_l = [jnp.where(bd > jnp.float32(cutoff), dummy, bl)
                  for bd, bl in zip(best_d, best_l)]

    # ---- O(k^2) pairwise vote (dummy excluded) -------------------------------
    eq = {}
    for i in range(k):
        for j in range(i + 1, k):
            eq[(i, j)] = (best_l[i] == best_l[j]).astype(jnp.int32)
    big = jnp.int32(num_classes + 1)            # count stride > any class id
    best_score = jnp.full((TH, Wd), -1, jnp.int32)
    winner = jnp.zeros((TH, Wd), jnp.int32)     # all-dummy -> class 0
    for i in range(k):
        cnt = jnp.ones((TH, Wd), jnp.int32)
        for j in range(k):
            if j != i:
                cnt = cnt + eq[(min(i, j), max(i, j))]
        score = jnp.where(best_l[i] == dummy, jnp.int32(-1), cnt * big - best_l[i])
        better = score > best_score
        winner = jnp.where(better, best_l[i], winner)
        best_score = jnp.where(better, score, best_score)

    out_ref[0, :, :] = winner


# ----------------------------------------------------------------------------
# Wrapper
# ----------------------------------------------------------------------------
def knn2d(depth, label, *, num_classes, k=3, kernel_size=(3, 3), sigma=1.0,
          cutoff=1.0, row_tile=32):
    B, C, H, W = depth.shape
    assert C == 1, "kNN2d semantics require a single depth channel"
    if isinstance(kernel_size, int):
        kernel_size = (kernel_size, kernel_size)
    kh, kw = kernel_size
    assert kh % 2 == 1 and kw % 2 == 1, "must be odd"
    assert k <= kh * kw
    ph, pw = kh // 2, kw // 2

    TH = _pick_row_tile(H, row_tile)
    n_rt = H // TH

    # Lane-dense width: multiple of 128 and at least W + pw so that every
    # lane rotation wraps onto zero-padded columns only.
    Wd = max(128, _round_up(W + pw, 128))

    Hd = H + 4 * ph            # double row-padded depth
    Hl = H + 2 * ph            # single row-padded labels

    g = gaussian_kernel_np((kh, kw), sigma)
    weights = tuple(float(v) for v in (1.0 - g).reshape(-1))
    # NOTE: all weights are > 0 for any sigma > 0 and kernel_size > 1; a zero
    # weight would produce 0*inf=NaN exactly as the reference module would.

    dpad = jnp.pad(depth[:, 0].astype(jnp.float32),
                   ((0, 0), (2 * ph, 2 * ph), (0, Wd - W)))
    lpad = jnp.pad(label.astype(jnp.int32),
                   ((0, 0), (ph, ph), (0, Wd - W)))

    kernel = functools.partial(
        _knn2d_kernel, TH=TH, H=H, W=W, Wd=Wd, kh=kh, kw=kw, k=k,
        num_classes=num_classes, cutoff=cutoff, weights=weights, ph=ph, pw=pw)

    # VMEM budget: resident (double-buffered) input blocks + output tile +
    # headroom, capped at 40 MiB so it is safe under v7x's 64 MiB per-TC VMEM.
    resident = 4 * (Hd * Wd + Hl * Wd)
    out_tile = 4 * TH * Wd
    vmem_limit = int(min(40 * 2 ** 20,
                         max(16 * 2 ** 20, 2 * (resident + out_tile) + 8 * 2 ** 20)))

    # Advisory cost so XLA schedules the wrapper-side pads / final slice well.
    K = kh * kw
    cost = pl.CostEstimate(
        flops=int(B * H * Wd * (2 * K * K + 30 * k + 60)),
        transcendentals=0,
        bytes_accessed=int(4 * B * (Hd * Wd + Hl * Wd + H * Wd)))

    # Megacore sharding: prefer the batch axis when B >= 2 so each TC keeps its
    # own resident input block; no-op on single-TC v5e/v6e.
    dims = ("parallel", "arbitrary") if B >= 2 else ("parallel", "parallel")

    out = pl.pallas_call(
        kernel,
        out_shape=jax.ShapeDtypeStruct((B, H, Wd), jnp.int32),
        grid=(B, n_rt),
        in_specs=[
            pl.BlockSpec((1, Hd, Wd), lambda b, t: (b, 0, 0)),  # resident across t
            pl.BlockSpec((1, Hl, Wd), lambda b, t: (b, 0, 0)),  # resident across t
        ],
        out_specs=pl.BlockSpec((1, TH, Wd), lambda b, t: (b, t, 0)),
        compiler_params=pltpu.CompilerParams(
            dimension_semantics=dims,
            vmem_limit_bytes=vmem_limit),
        cost_estimate=cost,
    )(dpad, lpad)

    return out[:, :, :W]


# ----------------------------------------------------------------------------
# Pure-JAX reference (same algorithm, batched) for a correctness check.
# ----------------------------------------------------------------------------
def knn2d_ref(depth, label, *, num_classes, k=3, kernel_size=(3, 3), sigma=1.0,
              cutoff=1.0):
    B, C, H, W = depth.shape
    kh, kw = kernel_size
    ph, pw = kh // 2, kw // 2
    g = gaussian_kernel_np((kh, kw), sigma)
    weights = tuple(float(v) for v in (1.0 - g).reshape(-1))

    d = depth[:, 0].astype(jnp.float32)
    dpad = jnp.pad(d, ((0, 0), (ph, ph), (pw, pw)))
    lpad = jnp.pad(label.astype(jnp.int32), ((0, 0), (ph, ph), (pw, pw)))
    inf = jnp.float32(jnp.inf)

    nb_depth, nb_label = [], []
    for dh in range(kh):
        for dw in range(kw):
            nd = dpad[:, dh:dh + H, dw:dw + W]
            nd = jnp.where(nd < 0.0, inf, nd)
            nb_depth.append(nd)
            nb_label.append(lpad[:, dh:dh + H, dw:dw + W])

    K = kh * kw
    jump_pad = [
        jnp.pad(jnp.abs(nb_depth[j] - d), ((0, 0), (ph, ph), (pw, pw)))
        for j in range(K)
    ]

    dist = []
    for j in range(K):
        acc = jnp.zeros((B, H, W), jnp.float32)
        idx = 0
        for dh2 in range(kh):
            for dw2 in range(kw):
                acc = acc + weights[idx] * jump_pad[j][:, dh2:dh2 + H, dw2:dw2 + W]
                idx += 1
        dist.append(acc)

    return _select_and_vote(dist, nb_label, k, num_classes, cutoff)


if __name__ == "__main__":
    B, C, H, W = 2, 1, 16, 16
    num_classes = 5

    key = jax.random.PRNGKey(0)
    kd, kl = jax.random.split(key)
    # include some negative depths to exercise the "invalid -> inf" path
    depth = jax.random.uniform(kd, (B, C, H, W), jnp.float32, minval=-0.3, maxval=2.0)
    label = jax.random.randint(kl, (B, H, W), 0, num_classes, dtype=jnp.int32)

    # row_tile=8 -> two row tiles per image: exercises the halo / r0 != 0 path.
    out = knn2d(depth, label, num_classes=num_classes, k=3, kernel_size=3,
                sigma=1.0, cutoff=1.0, row_tile=8)
    out = jax.block_until_ready(out)

    ref = knn2d_ref(depth, label, num_classes=num_classes, k=3, kernel_size=(3, 3),
                    sigma=1.0, cutoff=1.0)
    ref = jax.block_until_ready(ref)

    np.testing.assert_array_equal(np.asarray(out), np.asarray(ref))
    print("KERNEL_OK")
</pallas_src>

<mosaic_0001>
module attributes {stable_mosaic.version = 11 : i64} {
  func.func @_knn2d_kernel(%arg0: i32, %arg1: i32, %arg2: memref<1x20x128xf32, #tpu.memory_space<vmem>>, %arg3: memref<1x18x128xi32, #tpu.memory_space<vmem>>, %arg4: memref<1x8x128xi32, #tpu.memory_space<vmem>>) attributes {dimension_semantics = [#tpu.dimension_semantics<parallel>, #tpu.dimension_semantics<arbitrary>], iteration_bounds = array<i64: 2, 2>, scalar_prefetch = 0 : i64, scratch_operands = 0 : i64, tpu.core_type = #tpu.core_type<tc>, window_params = [{transform_indices = @transform_0, window_bounds = array<i64: 1, 20, 128>}, {transform_indices = @transform_1, window_bounds = array<i64: 1, 18, 128>}, {transform_indices = @transform_2, window_bounds = array<i64: 1, 8, 128>}]} {
    %c8_i32 = arith.constant 8 : i32
    %0 = arith.muli %arg1, %c8_i32 : i32
    %1 = tpu.assume_multiple %0, 8 : i32
    %c0 = arith.constant 0 : index
    %2 = arith.index_cast %1 : i32 to index
    %c0_0 = arith.constant 0 : index
    %3 = vector.load %arg2[%c0, %2, %c0_0] : memref<1x20x128xf32, #tpu.memory_space<vmem>>, vector<1x12x128xf32>
    %4 = vector.shape_cast %3 : vector<1x12x128xf32> to vector<12x128xf32>
    %c0_1 = arith.constant 0 : index
    %5 = arith.index_cast %1 : i32 to index
    %c0_2 = arith.constant 0 : index
    %6 = vector.load %arg3[%c0_1, %5, %c0_2] : memref<1x18x128xi32, #tpu.memory_space<vmem>>, vector<1x10x128xi32>
    %7 = vector.shape_cast %6 : vector<1x10x128xi32> to vector<10x128xi32>
    %cst = arith.constant 0.000000e+00 : f32
    %8 = vector.broadcast %cst : f32 to vector<12x128xf32>
    %9 = arith.cmpf olt, %4, %8 : vector<12x128xf32>
    %cst_3 = arith.constant 0x7F800000 : f32
    %10 = vector.broadcast %cst_3 : f32 to vector<12x128xf32>
    %11 = arith.select %9, %10, %4 : vector<12x128xi1>, vector<12x128xf32>
    %12 = vector.extract_strided_slice %4 {offsets = [1, 0], sizes = [10, 128], strides = [1, 1]} : vector<12x128xf32> to vector<10x128xf32>
    %13 = tpu.iota {dimensions = array<i32: 0>} : vector<10x128xi32>
    %14 = vector.broadcast %1 : i32 to vector<10x128xi32>
    %15 = arith.addi %14, %13 : vector<10x128xi32>
    %16 = tpu.iota {dimensions = array<i32: 1>} : vector<10x128xi32>
    %c1_i32 = arith.constant 1 : i32
    %17 = vector.broadcast %c1_i32 : i32 to vector<10x128xi32>
    %18 = arith.cmpi sge, %15, %17 : vector<10x128xi32>
    %c17_i32 = arith.constant 17 : i32
    %19 = vector.broadcast %c17_i32 : i32 to vector<10x128xi32>
    %20 = arith.cmpi slt, %15, %19 : vector<10x128xi32>
    %21 = arith.andi %18, %20 : vector<10x128xi1>
    %c16_i32 = arith.constant 16 : i32
    %22 = vector.broadcast %c16_i32 : i32 to vector<10x128xi32>
    %23 = arith.cmpi slt, %16, %22 : vector<10x128xi32>
    %24 = arith.andi %21, %23 : vector<10x128xi1>
    %c1_i32_4 = arith.constant 1 : i32
    %25 = tpu.dynamic_rotate %11 by %c1_i32_4 dim 1 : vector<12x128xf32>, i32 -> vector<12x128xf32>
    %c127_i32 = arith.constant 127 : i32
    %26 = tpu.dynamic_rotate %11 by %c127_i32 dim 1 : vector<12x128xf32>, i32 -> vector<12x128xf32>
    %c1_i32_5 = arith.constant 1 : i32
    %27 = tpu.dynamic_rotate %7 by %c1_i32_5 dim 1 : vector<10x128xi32>, i32 -> vector<10x128xi32>
    %c127_i32_6 = arith.constant 127 : i32
    %28 = tpu.dynamic_rotate %7 by %c127_i32_6 dim 1 : vector<10x128xi32>, i32 -> vector<10x128xi32>
    %cst_7 = arith.constant 0x7F800000 : f32
    %29 = vector.broadcast %cst_7 : f32 to vector<8x128xf32>
    %cst_8 = arith.constant 0x7F800000 : f32
    %30 = vector.broadcast %cst_8 : f32 to vector<8x128xf32>
    %cst_9 = arith.constant 0x7F800000 : f32
    %31 = vector.broadcast %cst_9 : f32 to vector<8x128xf32>
    %c0_i32 = arith.constant 0 : i32
    %32 = vector.broadcast %c0_i32 : i32 to vector<8x128xi32>
    %c0_i32_10 = arith.constant 0 : i32
    %33 = vector.broadcast %c0_i32_10 : i32 to vector<8x128xi32>
    %c0_i32_11 = arith.constant 0 : i32
    %34 = vector.broadcast %c0_i32_11 : i32 to vector<8x128xi32>
    %35 = vector.extract_strided_slice %25 {offsets = [0, 0], sizes = [10, 128], strides = [1, 1]} : vector<12x128xf32> to vector<10x128xf32>
    %36 = arith.subf %35, %12 : vector<10x128xf32>
    %37 = math.absf %36 : vector<10x128xf32>
    %cst_12 = arith.constant 0.000000e+00 : f32
    %38 = vector.broadcast %cst_12 : f32 to vector<10x128xf32>
    %39 = arith.select %24, %37, %38 : vector<10x128xi1>, vector<10x128xf32>
    %c1_i32_13 = arith.constant 1 : i32
    %40 = tpu.dynamic_rotate %39 by %c1_i32_13 dim 1 : vector<10x128xf32>, i32 -> vector<10x128xf32>
    %c127_i32_14 = arith.constant 127 : i32
    %41 = tpu.dynamic_rotate %39 by %c127_i32_14 dim 1 : vector<10x128xf32>, i32 -> vector<10x128xf32>
    %cst_15 = arith.constant 0.000000e+00 : f32
    %42 = vector.broadcast %cst_15 : f32 to vector<8x128xf32>
    %43 = vector.extract_strided_slice %40 {offsets = [0, 0], sizes = [8, 128], strides = [1, 1]} : vector<10x128xf32> to vector<8x128xf32>
    %cst_16 = arith.constant 0.924886405 : f32
    %44 = vector.broadcast %cst_16 : f32 to vector<8x128xf32>
    %45 = arith.mulf %44, %43 : vector<8x128xf32>
    %46 = arith.addf %42, %45 : vector<8x128xf32>
    %47 = vector.extract_strided_slice %39 {offsets = [0, 0], sizes = [8, 128], strides = [1, 1]} : vector<10x128xf32> to vector<8x128xf32>
    %cst_17 = arith.constant 0.876158595 : f32
    %48 = vector.broadcast %cst_17 : f32 to vector<8x128xf32>
    %49 = arith.mulf %48, %47 : vector<8x128xf32>
    %50 = arith.addf %46, %49 : vector<8x128xf32>
    %51 = vector.extract_strided_slice %41 {offsets = [0, 0], sizes = [8, 128], strides = [1, 1]} : vector<10x128xf32> to vector<8x128xf32>
    %cst_18 = arith.constant 0.924886405 : f32
    %52 = vector.broadcast %cst_18 : f32 to vector<8x128xf32>
    %53 = arith.mulf %52, %51 : vector<8x128xf32>
    %54 = arith.addf %50, %53 : vector<8x128xf32>
    %55 = vector.extract_strided_slice %40 {offsets = [1, 0], sizes = [8, 128], strides = [1, 1]} : vector<10x128xf32> to vector<8x128xf32>
    %cst_19 = arith.constant 0.876158595 : f32
    %56 = vector.broadcast %cst_19 : f32 to vector<8x128xf32>
    %57 = arith.mulf %56, %55 : vector<8x128xf32>
    %58 = arith.addf %54, %57 : vector<8x128xf32>
    %59 = vector.extract_strided_slice %39 {offsets = [1, 0], sizes = [8, 128], strides = [1, 1]} : vector<10x128xf32> to vector<8x128xf32>
    %cst_20 = arith.constant 0.795820057 : f32
    %60 = vector.broadcast %cst_20 : f32 to vector<8x128xf32>
    %61 = arith.mulf %60, %59 : vector<8x128xf32>
    %62 = arith.addf %58, %61 : vector<8x128xf32>
    %63 = vector.extract_strided_slice %41 {offsets = [1, 0], sizes = [8, 128], strides = [1, 1]} : vector<10x128xf32> to vector<8x128xf32>
    %cst_21 = arith.constant 0.876158595 : f32
    %64 = vector.broadcast %cst_21 : f32 to vector<8x128xf32>
    %65 = arith.mulf %64, %63 : vector<8x128xf32>
    %66 = arith.addf %62, %65 : vector<8x128xf32>
    %67 = vector.extract_strided_slice %40 {offsets = [2, 0], sizes = [8, 128], strides = [1, 1]} : vector<10x128xf32> to vector<8x128xf32>
    %cst_22 = arith.constant 0.924886405 : f32
    %68 = vector.broadcast %cst_22 : f32 to vector<8x128xf32>
    %69 = arith.mulf %68, %67 : vector<8x128xf32>
    %70 = arith.addf %66, %69 : vector<8x128xf32>
    %71 = vector.extract_strided_slice %39 {offsets = [2, 0], sizes = [8, 128], strides = [1, 1]} : vector<10x128xf32> to vector<8x128xf32>
    %cst_23 = arith.constant 0.876158595 : f32
    %72 = vector.broadcast %cst_23 : f32 to vector<8x128xf32>
    %73 = arith.mulf %72, %71 : vector<8x128xf32>
    %74 = arith.addf %70, %73 : vector<8x128xf32>
    %75 = vector.extract_strided_slice %41 {offsets = [2, 0], sizes = [8, 128], strides = [1, 1]} : vector<10x128xf32> to vector<8x128xf32>
    %cst_24 = arith.constant 0.924886405 : f32
    %76 = vector.broadcast %cst_24 : f32 to vector<8x128xf32>
    %77 = arith.mulf %76, %75 : vector<8x128xf32>
    %78 = arith.addf %74, %77 : vector<8x128xf32>
    %79 = vector.extract_strided_slice %27 {offsets = [0, 0], sizes = [8, 128], strides = [1, 1]} : vector<10x128xi32> to vector<8x128xi32>
    %80 = arith.cmpf olt, %78, %29 : vector<8x128xf32>
    %81 = arith.select %80, %78, %29 : vector<8x128xi1>, vector<8x128xf32>
    %82 = arith.select %80, %79, %32 : vector<8x128xi1>, vector<8x128xi32>
    %83 = arith.select %80, %29, %78 : vector<8x128xi1>, vector<8x128xf32>
    %84 = arith.select %80, %32, %79 : vector<8x128xi1>, vector<8x128xi32>
    %85 = arith.cmpf olt, %83, %30 : vector<8x128xf32>
    %86 = arith.select %85, %83, %30 : vector<8x128xi1>, vector<8x128xf32>
    %87 = arith.select %85, %84, %33 : vector<8x128xi1>, vector<8x128xi32>
    %88 = arith.select %85, %30, %83 : vector<8x128xi1>, vector<8x128xf32>
    %89 = arith.select %85, %33, %84 : vector<8x128xi1>, vector<8x128xi32>
    %90 = arith.cmpf olt, %88, %31 : vector<8x128xf32>
    %91 = arith.select %90, %88, %31 : vector<8x128xi1>, vector<8x128xf32>
    %92 = arith.select %90, %89, %34 : vector<8x128xi1>, vector<8x128xi32>
    %93 = vector.extract_strided_slice %11 {offsets = [0, 0], sizes = [10, 128], strides = [1, 1]} : vector<12x128xf32> to vector<10x128xf32>
    %94 = arith.subf %93, %12 : vector<10x128xf32>
    %95 = math.absf %94 : vector<10x128xf32>
    %cst_25 = arith.constant 0.000000e+00 : f32
    %96 = vector.broadcast %cst_25 : f32 to vector<10x128xf32>
    %97 = arith.select %24, %95, %96 : vector<10x128xi1>, vector<10x128xf32>
    %c1_i32_26 = arith.constant 1 : i32
    %98 = tpu.dynamic_rotate %97 by %c1_i32_26 dim 1 : vector<10x128xf32>, i32 -> vector<10x128xf32>
    %c127_i32_27 = arith.constant 127 : i32
    %99 = tpu.dynamic_rotate %97 by %c127_i32_27 dim 1 : vector<10x128xf32>, i32 -> vector<10x128xf32>
    %cst_28 = arith.constant 0.000000e+00 : f32
    %100 = vector.broadcast %cst_28 : f32 to vector<8x128xf32>
    %101 = vector.extract_strided_slice %98 {offsets = [0, 0], sizes = [8, 128], strides = [1, 1]} : vector<10x128xf32> to vector<8x128xf32>
    %cst_29 = arith.constant 0.924886405 : f32
    %102 = vector.broadcast %cst_29 : f32 to vector<8x128xf32>
    %103 = arith.mulf %102, %101 : vector<8x128xf32>
    %104 = arith.addf %100, %103 : vector<8x128xf32>
    %105 = vector.extract_strided_slice %97 {offsets = [0, 0], sizes = [8, 128], strides = [1, 1]} : vector<10x128xf32> to vector<8x128xf32>
    %cst_30 = arith.constant 0.876158595 : f32
    %106 = vector.broadcast %cst_30 : f32 to vector<8x128xf32>
    %107 = arith.mulf %106, %105 : vector<8x128xf32>
    %108 = arith.addf %104, %107 : vector<8x128xf32>
    %109 = vector.extract_strided_slice %99 {offsets = [0, 0], sizes = [8, 128], strides = [1, 1]} : vector<10x128xf32> to vector<8x128xf32>
    %cst_31 = arith.constant 0.924886405 : f32
    %110 = vector.broadcast %cst_31 : f32 to vector<8x128xf32>
    %111 = arith.mulf %110, %109 : vector<8x128xf32>
    %112 = arith.addf %108, %111 : vector<8x128xf32>
    %113 = vector.extract_strided_slice %98 {offsets = [1, 0], sizes = [8, 128], strides = [1, 1]} : vector<10x128xf32> to vector<8x128xf32>
    %cst_32 = arith.constant 0.876158595 : f32
    %114 = vector.broadcast %cst_32 : f32 to vector<8x128xf32>
    %115 = arith.mulf %114, %113 : vector<8x128xf32>
    %116 = arith.addf %112, %115 : vector<8x128xf32>
    %117 = vector.extract_strided_slice %97 {offsets = [1, 0], sizes = [8, 128], strides = [1, 1]} : vector<10x128xf32> to vector<8x128xf32>
    %cst_33 = arith.constant 0.795820057 : f32
    %118 = vector.broadcast %cst_33 : f32 to vector<8x128xf32>
    %119 = arith.mulf %118, %117 : vector<8x128xf32>
    %120 = arith.addf %116, %119 : vector<8x128xf32>
    %121 = vector.extract_strided_slice %99 {offsets = [1, 0], sizes = [8, 128], strides = [1, 1]} : vector<10x128xf32> to vector<8x128xf32>
    %cst_34 = arith.constant 0.876158595 : f32
    %122 = vector.broadcast %cst_34 : f32 to vector<8x128xf32>
    %123 = arith.mulf %122, %121 : vector<8x128xf32>
    %124 = arith.addf %120, %123 : vector<8x128xf32>
    %125 = vector.extract_strided_slice %98 {offsets = [2, 0], sizes = [8, 128], strides = [1, 1]} : vector<10x128xf32> to vector<8x128xf32>
    %cst_35 = arith.constant 0.924886405 : f32
    %126 = vector.broadcast %cst_35 : f32 to vector<8x128xf32>
    %127 = arith.mulf %126, %125 : vector<8x128xf32>
    %128 = arith.addf %124, %127 : vector<8x128xf32>
    %129 = vector.extract_strided_slice %97 {offsets = [2, 0], sizes = [8, 128], strides = [1, 1]} : vector<10x128xf32> to vector<8x128xf32>
    %cst_36 = arith.constant 0.876158595 : f32
    %130 = vector.broadcast %cst_36 : f32 to vector<8x128xf32>
    %131 = arith.mulf %130, %129 : vector<8x128xf32>
    %132 = arith.addf %128, %131 : vector<8x128xf32>
    %133 = vector.extract_strided_slice %99 {offsets = [2, 0], sizes = [8, 128], strides = [1, 1]} : vector<10x128xf32> to vector<8x128xf32>
    %cst_37 = arith.constant 0.924886405 : f32
    %134 = vector.broadcast %cst_37 : f32 to vector<8x128xf32>
    %135 = arith.mulf %134, %133 : vector<8x128xf32>
    %136 = arith.addf %132, %135 : vector<8x128xf32>
    %137 = vector.extract_strided_slice %7 {offsets = [0, 0], sizes = [8, 128], strides = [1, 1]} : vector<10x128xi32> to vector<8x128xi32>
    %138 = arith.cmpf olt, %136, %81 : vector<8x128xf32>
    %139 = arith.select %138, %136, %81 : vector<8x128xi1>, vector<8x128xf32>
    %140 = arith.select %138, %137, %82 : vector<8x128xi1>, vector<8x128xi32>
    %141 = arith.select %138, %81, %136 : vector<8x128xi1>, vector<8x128xf32>
    %142 = arith.select %138, %82, %137 : vector<8x128xi1>, vector<8x128xi32>
    %143 = arith.cmpf olt, %141, %86 : vector<8x128xf32>
    %144 = arith.select %143, %141, %86 : vector<8x128xi1>, vector<8x128xf32>
    %145 = arith.select %143, %142, %87 : vector<8x128xi1>, vector<8x128xi32>
    %146 = arith.select %143, %86, %141 : vector<8x128xi1>, vector<8x128xf32>
    %147 = arith.select %143, %87, %142 : vector<8x128xi1>, vector<8x128xi32>
    %148 = arith.cmpf olt, %146, %91 : vector<8x128xf32>
    %149 = arith.select %148, %146, %91 : vector<8x128xi1>, vector<8x128xf32>
    %150 = arith.select %148, %147, %92 : vector<8x128xi1>, vector<8x128xi32>
    %151 = vector.extract_strided_slice %26 {offsets = [0, 0], sizes = [10, 128], strides = [1, 1]} : vector<12x128xf32> to vector<10x128xf32>
    %152 = arith.subf %151, %12 : vector<10x128xf32>
    %153 = math.absf %152 : vector<10x128xf32>
    %cst_38 = arith.constant 0.000000e+00 : f32
    %154 = vector.broadcast %cst_38 : f32 to vector<10x128xf32>
    %155 = arith.select %24, %153, %154 : vector<10x128xi1>, vector<10x128xf32>
    %c1_i32_39 = arith.constant 1 : i32
    %156 = tpu.dynamic_rotate %155 by %c1_i32_39 dim 1 : vector<10x128xf32>, i32 -> vector<10x128xf32>
    %c127_i32_40 = arith.constant 127 : i32
    %157 = tpu.dynamic_rotate %155 by %c127_i32_40 dim 1 : vector<10x128xf32>, i32 -> vector<10x128xf32>
    %cst_41 = arith.constant 0.000000e+00 : f32
    %158 = vector.broadcast %cst_41 : f32 to vector<8x128xf32>
    %159 = vector.extract_strided_slice %156 {offsets = [0, 0], sizes = [8, 128], strides = [1, 1]} : vector<10x128xf32> to vector<8x128xf32>
    %cst_42 = arith.constant 0.924886405 : f32
    %160 = vector.broadcast %cst_42 : f32 to vector<8x128xf32>
    %161 = arith.mulf %160, %159 : vector<8x128xf32>
    %162 = arith.addf %158, %161 : vector<8x128xf32>
    %163 = vector.extract_strided_slice %155 {offsets = [0, 0], sizes = [8, 128], strides = [1, 1]} : vector<10x128xf32> to vector<8x128xf32>
    %cst_43 = arith.constant 0.876158595 : f32
    %164 = vector.broadcast %cst_43 : f32 to vector<8x128xf32>
    %165 = arith.mulf %164, %163 : vector<8x128xf32>
    %166 = arith.addf %162, %165 : vector<8x128xf32>
    %167 = vector.extract_strided_slice %157 {offsets = [0, 0], sizes = [8, 128], strides = [1, 1]} : vector<10x128xf32> to vector<8x128xf32>
    %cst_44 = arith.constant 0.924886405 : f32
    %168 = vector.broadcast %cst_44 : f32 to vector<8x128xf32>
    %169 = arith.mulf %168, %167 : vector<8x128xf32>
    %170 = arith.addf %166, %169 : vector<8x128xf32>
    %171 = vector.extract_strided_slice %156 {offsets = [1, 0], sizes = [8, 128], strides = [1, 1]} : vector<10x128xf32> to vector<8x128xf32>
    %cst_45 = arith.constant 0.876158595 : f32
    %172 = vector.broadcast %cst_45 : f32 to vector<8x128xf32>
    %173 = arith.mulf %172, %171 : vector<8x128xf32>
    %174 = arith.addf %170, %173 : vector<8x128xf32>
    %175 = vector.extract_strided_slice %155 {offsets = [1, 0], sizes = [8, 128], strides = [1, 1]} : vector<10x128xf32> to vector<8x128xf32>
    %cst_46 = arith.constant 0.795820057 : f32
    %176 = vector.broadcast %cst_46 : f32 to vector<8x128xf32>
    %177 = arith.mulf %176, %175 : vector<8x128xf32>
    %178 = arith.addf %174, %177 : vector<8x128xf32>
    %179 = vector.extract_strided_slice %157 {offsets = [1, 0], sizes = [8, 128], strides = [1, 1]} : vector<10x128xf32> to vector<8x128xf32>
    %cst_47 = arith.constant 0.876158595 : f32
    %180 = vector.broadcast %cst_47 : f32 to vector<8x128xf32>
    %181 = arith.mulf %180, %179 : vector<8x128xf32>
    %182 = arith.addf %178, %181 : vector<8x128xf32>
    %183 = vector.extract_strided_slice %156 {offsets = [2, 0], sizes = [8, 128], strides = [1, 1]} : vector<10x128xf32> to vector<8x128xf32>
    %cst_48 = arith.constant 0.924886405 : f32
    %184 = vector.broadcast %cst_48 : f32 to vector<8x128xf32>
    %185 = arith.mulf %184, %183 : vector<8x128xf32>
    %186 = arith.addf %182, %185 : vector<8x128xf32>
    %187 = vector.extract_strided_slice %155 {offsets = [2, 0], sizes = [8, 128], strides = [1, 1]} : vector<10x128xf32> to vector<8x128xf32>
    %cst_49 = arith.constant 0.876158595 : f32
    %188 = vector.broadcast %cst_49 : f32 to vector<8x128xf32>
    %189 = arith.mulf %188, %187 : vector<8x128xf32>
    %190 = arith.addf %186, %189 : vector<8x128xf32>
    %191 = vector.extract_strided_slice %157 {offsets = [2, 0], sizes = [8, 128], strides = [1, 1]} : vector<10x128xf32> to vector<8x128xf32>
    %cst_50 = arith.constant 0.924886405 : f32
    %192 = vector.broadcast %cst_50 : f32 to vector<8x128xf32>
    %193 = arith.mulf %192, %191 : vector<8x128xf32>
    %194 = arith.addf %190, %193 : vector<8x128xf32>
    %195 = vector.extract_strided_slice %28 {offsets = [0, 0], sizes = [8, 128], strides = [1, 1]} : vector<10x128xi32> to vector<8x128xi32>
    %196 = arith.cmpf olt, %194, %139 : vector<8x128xf32>
    %197 = arith.select %196, %194, %139 : vector<8x128xi1>, vector<8x128xf32>
    %198 = arith.select %196, %195, %140 : vector<8x128xi1>, vector<8x128xi32>
    %199 = arith.select %196, %139, %194 : vector<8x128xi1>, vector<8x128xf32>
    %200 = arith.select %196, %140, %195 : vector<8x128xi1>, vector<8x128xi32>
    %201 = arith.cmpf olt, %199, %144 : vector<8x128xf32>
    %202 = arith.select %201, %199, %144 : vector<8x128xi1>, vector<8x128xf32>
    %203 = arith.select %201, %200, %145 : vector<8x128xi1>, vector<8x128xi32>
    %204 = arith.select %201, %144, %199 : vector<8x128xi1>, vector<8x128xf32>
    %205 = arith.select %201, %145, %200 : vector<8x128xi1>, vector<8x128xi32>
    %206 = arith.cmpf olt, %204, %149 : vector<8x128xf32>
    %207 = arith.select %206, %204, %149 : vector<8x128xi1>, vector<8x128xf32>
    %208 = arith.select %206, %205, %150 : vector<8x128xi1>, vector<8x128xi32>
    %209 = vector.extract_strided_slice %25 {offsets = [1, 0], sizes = [10, 128], strides = [1, 1]} : vector<12x128xf32> to vector<10x128xf32>
    %210 = arith.subf %209, %12 : vector<10x128xf32>
    %211 = math.absf %210 : vector<10x128xf32>
    %cst_51 = arith.constant 0.000000e+00 : f32
    %212 = vector.broadcast %cst_51 : f32 to vector<10x128xf32>
    %213 = arith.select %24, %211, %212 : vector<10x128xi1>, vector<10x128xf32>
    %c1_i32_52 = arith.constant 1 : i32
    %214 = tpu.dynamic_rotate %213 by %c1_i32_52 dim 1 : vector<10x128xf32>, i32 -> vector<10x128xf32>
    %c127_i32_53 = arith.constant 127 : i32
    %215 = tpu.dynamic_rotate %213 by %c127_i32_53 dim 1 : vector<10x128xf32>, i32 -> vector<10x128xf32>
    %cst_54 = arith.constant 0.000000e+00 : f32
    %216 = vector.broadcast %cst_54 : f32 to vector<8x128xf32>
    %217 = vector.extract_strided_slice %214 {offsets = [0, 0], sizes = [8, 128], strides = [1, 1]} : vector<10x128xf32> to vector<8x128xf32>
    %cst_55 = arith.constant 0.924886405 : f32
    %218 = vector.broadcast %cst_55 : f32 to vector<8x128xf32>
    %219 = arith.mulf %218, %217 : vector<8x128xf32>
    %220 = arith.addf %216, %219 : vector<8x128xf32>
    %221 = vector.extract_strided_slice %213 {offsets = [0, 0], sizes = [8, 128], strides = [1, 1]} : vector<10x128xf32> to vector<8x128xf32>
    %cst_56 = arith.constant 0.876158595 : f32
    %222 = vector.broadcast %cst_56 : f32 to vector<8x128xf32>
    %223 = arith.mulf %222, %221 : vector<8x128xf32>
    %224 = arith.addf %220, %223 : vector<8x128xf32>
    %225 = vector.extract_strided_slice %215 {offsets = [0, 0], sizes = [8, 128], strides = [1, 1]} : vector<10x128xf32> to vector<8x128xf32>
    %cst_57 = arith.constant 0.924886405 : f32
    %226 = vector.broadcast %cst_57 : f32 to vector<8x128xf32>
    %227 = arith.mulf %226, %225 : vector<8x128xf32>
    %228 = arith.addf %224, %227 : vector<8x128xf32>
    %229 = vector.extract_strided_slice %214 {offsets = [1, 0], sizes = [8, 128], strides = [1, 1]} : vector<10x128xf32> to vector<8x128xf32>
    %cst_58 = arith.constant 0.876158595 : f32
    %230 = vector.broadcast %cst_58 : f32 to vector<8x128xf32>
    %231 = arith.mulf %230, %229 : vector<8x128xf32>
    %232 = arith.addf %228, %231 : vector<8x128xf32>
    %233 = vector.extract_strided_slice %213 {offsets = [1, 0], sizes = [8, 128], strides = [1, 1]} : vector<10x128xf32> to vector<8x128xf32>
    %cst_59 = arith.constant 0.795820057 : f32
    %234 = vector.broadcast %cst_59 : f32 to vector<8x128xf32>
    %235 = arith.mulf %234, %233 : vector<8x128xf32>
    %236 = arith.addf %232, %235 : vector<8x128xf32>
    %237 = vector.extract_strided_slice %215 {offsets = [1, 0], sizes = [8, 128], strides = [1, 1]} : vector<10x128xf32> to vector<8x128xf32>
    %cst_60 = arith.constant 0.876158595 : f32
    %238 = vector.broadcast %cst_60 : f32 to vector<8x128xf32>
    %239 = arith.mulf %238, %237 : vector<8x128xf32>
    %240 = arith.addf %236, %239 : vector<8x128xf32>
    %241 = vector.extract_strided_slice %214 {offsets = [2, 0], sizes = [8, 128], strides = [1, 1]} : vector<10x128xf32> to vector<8x128xf32>
    %cst_61 = arith.constant 0.924886405 : f32
    %242 = vector.broadcast %cst_61 : f32 to vector<8x128xf32>
    %243 = arith.mulf %242, %241 : vector<8x128xf32>
    %244 = arith.addf %240, %243 : vector<8x128xf32>
    %245 = vector.extract_strided_slice %213 {offsets = [2, 0], sizes = [8, 128], strides = [1, 1]} : vector<10x128xf32> to vector<8x128xf32>
    %cst_62 = arith.constant 0.876158595 : f32
    %246 = vector.broadcast %cst_62 : f32 to vector<8x128xf32>
    %247 = arith.mulf %246, %245 : vector<8x128xf32>
    %248 = arith.addf %244, %247 : vector<8x128xf32>
    %249 = vector.extract_strided_slice %215 {offsets = [2, 0], sizes = [8, 128], strides = [1, 1]} : vector<10x128xf32> to vector<8x128xf32>
    %cst_63 = arith.constant 0.924886405 : f32
    %250 = vector.broadcast %cst_63 : f32 to vector<8x128xf32>
    %251 = arith.mulf %250, %249 : vector<8x128xf32>
    %252 = arith.addf %248, %251 : vector<8x128xf32>
    %253 = vector.extract_strided_slice %27 {offsets = [1, 0], sizes = [8, 128], strides = [1, 1]} : vector<10x128xi32> to vector<8x128xi32>
    %254 = arith.cmpf olt, %252, %197 : vector<8x128xf32>
    %255 = arith.select %254, %252, %197 : vector<8x128xi1>, vector<8x128xf32>
    %256 = arith.select %254, %253, %198 : vector<8x128xi1>, vector<8x128xi32>
    %257 = arith.select %254, %197, %252 : vector<8x128xi1>, vector<8x128xf32>
    %258 = arith.select %254, %198, %253 : vector<8x128xi1>, vector<8x128xi32>
    %259 = arith.cmpf olt, %257, %202 : vector<8x128xf32>
    %260 = arith.select %259, %257, %202 : vector<8x128xi1>, vector<8x128xf32>
    %261 = arith.select %259, %258, %203 : vector<8x128xi1>, vector<8x128xi32>
    %262 = arith.select %259, %202, %257 : vector<8x128xi1>, vector<8x128xf32>
    %263 = arith.select %259, %203, %258 : vector<8x128xi1>, vector<8x128xi32>
    %264 = arith.cmpf olt, %262, %207 : vector<8x128xf32>
    %265 = arith.select %264, %262, %207 : vector<8x128xi1>, vector<8x128xf32>
    %266 = arith.select %264, %263, %208 : vector<8x128xi1>, vector<8x128xi32>
    %267 = vector.extract_strided_slice %11 {offsets = [1, 0], sizes = [10, 128], strides = [1, 1]} : vector<12x128xf32> to vector<10x128xf32>
    %268 = arith.subf %267, %12 : vector<10x128xf32>
    %269 = math.absf %268 : vector<10x128xf32>
    %cst_64 = arith.constant 0.000000e+00 : f32
    %270 = vector.broadcast %cst_64 : f32 to vector<10x128xf32>
    %271 = arith.select %24, %269, %270 : vector<10x128xi1>, vector<10x128xf32>
    %c1_i32_65 = arith.constant 1 : i32
    %272 = tpu.dynamic_rotate %271 by %c1_i32_65 dim 1 : vector<10x128xf32>, i32 -> vector<10x128xf32>
    %c127_i32_66 = arith.constant 127 : i32
    %273 = tpu.dynamic_rotate %271 by %c127_i32_66 dim 1 : vector<10x128xf32>, i32 -> vector<10x128xf32>
    %cst_67 = arith.constant 0.000000e+00 : f32
    %274 = vector.broadcast %cst_67 : f32 to vector<8x128xf32>
    %275 = vector.extract_strided_slice %272 {offsets = [0, 0], sizes = [8, 128], strides = [1, 1]} : vector<10x128xf32> to vector<8x128xf32>
    %cst_68 = arith.constant 0.924886405 : f32
    %276 = vector.broadcast %cst_68 : f32 to vector<8x128xf32>
    %277 = arith.mulf %276, %275 : vector<8x128xf32>
    %278 = arith.addf %274, %277 : vector<8x128xf32>
    %279 = vector.extract_strided_slice %271 {offsets = [0, 0], sizes = [8, 128], strides = [1, 1]} : vector<10x128xf32> to vector<8x128xf32>
    %cst_69 = arith.constant 0.876158595 : f32
    %280 = vector.broadcast %cst_69 : f32 to vector<8x128xf32>
    %281 = arith.mulf %280, %279 : vector<8x128xf32>
    %282 = arith.addf %278, %281 : vector<8x128xf32>
    %283 = vector.extract_strided_slice %273 {offsets = [0, 0], sizes = [8, 128], strides = [1, 1]} : vector<10x128xf32> to vector<8x128xf32>
    %cst_70 = arith.constant 0.924886405 : f32
    %284 = vector.broadcast %cst_70 : f32 to vector<8x128xf32>
    %285 = arith.mulf %284, %283 : vector<8x128xf32>
    %286 = arith.addf %282, %285 : vector<8x128xf32>
    %287 = vector.extract_strided_slice %272 {offsets = [1, 0], sizes = [8, 128], strides = [1, 1]} : vector<10x128xf32> to vector<8x128xf32>
    %cst_71 = arith.constant 0.876158595 : f32
    %288 = vector.broadcast %cst_71 : f32 to vector<8x128xf32>
    %289 = arith.mulf %288, %287 : vector<8x128xf32>
    %290 = arith.addf %286, %289 : vector<8x128xf32>
    %291 = vector.extract_strided_slice %271 {offsets = [1, 0], sizes = [8, 128], strides = [1, 1]} : vector<10x128xf32> to vector<8x128xf32>
    %cst_72 = arith.constant 0.795820057 : f32
    %292 = vector.broadcast %cst_72 : f32 to vector<8x128xf32>
    %293 = arith.mulf %292, %291 : vector<8x128xf32>
    %294 = arith.addf %290, %293 : vector<8x128xf32>
    %295 = vector.extract_strided_slice %273 {offsets = [1, 0], sizes = [8, 128], strides = [1, 1]} : vector<10x128xf32> to vector<8x128xf32>
    %cst_73 = arith.constant 0.876158595 : f32
    %296 = vector.broadcast %cst_73 : f32 to vector<8x128xf32>
    %297 = arith.mulf %296, %295 : vector<8x128xf32>
    %298 = arith.addf %294, %297 : vector<8x128xf32>
    %299 = vector.extract_strided_slice %272 {offsets = [2, 0], sizes = [8, 128], strides = [1, 1]} : vector<10x128xf32> to vector<8x128xf32>
    %cst_74 = arith.constant 0.924886405 : f32
    %300 = vector.broadcast %cst_74 : f32 to vector<8x128xf32>
    %301 = arith.mulf %300, %299 : vector<8x128xf32>
    %302 = arith.addf %298, %301 : vector<8x128xf32>
    %303 = vector.extract_strided_slice %271 {offsets = [2, 0], sizes = [8, 128], strides = [1, 1]} : vector<10x128xf32> to vector<8x128xf32>
    %cst_75 = arith.constant 0.876158595 : f32
    %304 = vector.broadcast %cst_75 : f32 to vector<8x128xf32>
    %305 = arith.mulf %304, %303 : vector<8x128xf32>
    %306 = arith.addf %302, %305 : vector<8x128xf32>
    %307 = vector.extract_strided_slice %273 {offsets = [2, 0], sizes = [8, 128], strides = [1, 1]} : vector<10x128xf32> to vector<8x128xf32>
    %cst_76 = arith.constant 0.924886405 : f32
    %308 = vector.broadcast %cst_76 : f32 to vector<8x128xf32>
    %309 = arith.mulf %308, %307 : vector<8x128xf32>
    %310 = arith.addf %306, %309 : vector<8x128xf32>
    %311 = vector.extract_strided_slice %7 {offsets = [1, 0], sizes = [8, 128], strides = [1, 1]} : vector<10x128xi32> to vector<8x128xi32>
    %312 = arith.cmpf olt, %310, %255 : vector<8x128xf32>
    %313 = arith.select %312, %310, %255 : vector<8x128xi1>, vector<8x128xf32>
    %314 = arith.select %312, %311, %256 : vector<8x128xi1>, vector<8x128xi32>
    %315 = arith.select %312, %255, %310 : vector<8x128xi1>, vector<8x128xf32>
    %316 = arith.select %312, %256, %311 : vector<8x128xi1>, vector<8x128xi32>
    %317 = arith.cmpf olt, %315, %260 : vector<8x128xf32>
    %318 = arith.select %317, %315, %260 : vector<8x128xi1>, vector<8x128xf32>
    %319 = arith.select %317, %316, %261 : vector<8x128xi1>, vector<8x128xi32>
    %320 = arith.select %317, %260, %315 : vector<8x128xi1>, vector<8x128xf32>
    %321 = arith.select %317, %261, %316 : vector<8x128xi1>, vector<8x128xi32>
    %322 = arith.cmpf olt, %320, %265 : vector<8x128xf32>
    %323 = arith.select %322, %320, %265 : vector<8x128xi1>, vector<8x128xf32>
    %324 = arith.select %322, %321, %266 : vector<8x128xi1>, vector<8x128xi32>
    %325 = vector.extract_strided_slice %26 {offsets = [1, 0], sizes = [10, 128], strides = [1, 1]} : vector<12x128xf32> to vector<10x128xf32>
    %326 = arith.subf %325, %12 : vector<10x128xf32>
    %327 = math.absf %326 : vector<10x128xf32>
    %cst_77 = arith.constant 0.000000e+00 : f32
    %328 = vector.broadcast %cst_77 : f32 to vector<10x128xf32>
    %329 = arith.select %24, %327, %328 : vector<10x128xi1>, vector<10x128xf32>
    %c1_i32_78 = arith.constant 1 : i32
    %330 = tpu.dynamic_rotate %329 by %c1_i32_78 dim 1 : vector<10x128xf32>, i32 -> vector<10x128xf32>
    %c127_i32_79 = arith.constant 127 : i32
    %331 = tpu.dynamic_rotate %329 by %c127_i32_79 dim 1 : vector<10x128xf32>, i32 -> vector<10x128xf32>
    %cst_80 = arith.constant 0.000000e+00 : f32
    %332 = vector.broadcast %cst_80 : f32 to vector<8x128xf32>
    %333 = vector.extract_strided_slice %330 {offsets = [0, 0], sizes = [8, 128], strides = [1, 1]} : vector<10x128xf32> to vector<8x128xf32>
    %cst_81 = arith.constant 0.924886405 : f32
    %334 = vector.broadcast %cst_81 : f32 to vector<8x128xf32>
    %335 = arith.mulf %334, %333 : vector<8x128xf32>
    %336 = arith.addf %332, %335 : vector<8x128xf32>
    %337 = vector.extract_strided_slice %329 {offsets = [0, 0], sizes = [8, 128], strides = [1, 1]} : vector<10x128xf32> to vector<8x128xf32>
    %cst_82 = arith.constant 0.876158595 : f32
    %338 = vector.broadcast %cst_82 : f32 to vector<8x128xf32>
    %339 = arith.mulf %338, %337 : vector<8x128xf32>
    %340 = arith.addf %336, %339 : vector<8x128xf32>
    %341 = vector.extract_strided_slice %331 {offsets = [0, 0], sizes = [8, 128], strides = [1, 1]} : vector<10x128xf32> to vector<8x128xf32>
    %cst_83 = arith.constant 0.924886405 : f32
    %342 = vector.broadcast %cst_83 : f32 to vector<8x128xf32>
    %343 = arith.mulf %342, %341 : vector<8x128xf32>
    %344 = arith.addf %340, %343 : vector<8x128xf32>
    %345 = vector.extract_strided_slice %330 {offsets = [1, 0], sizes = [8, 128], strides = [1, 1]} : vector<10x128xf32> to vector<8x128xf32>
    %cst_84 = arith.constant 0.876158595 : f32
    %346 = vector.broadcast %cst_84 : f32 to vector<8x128xf32>
    %347 = arith.mulf %346, %345 : vector<8x128xf32>
    %348 = arith.addf %344, %347 : vector<8x128xf32>
    %349 = vector.extract_strided_slice %329 {offsets = [1, 0], sizes = [8, 128], strides = [1, 1]} : vector<10x128xf32> to vector<8x128xf32>
    %cst_85 = arith.constant 0.795820057 : f32
    %350 = vector.broadcast %cst_85 : f32 to vector<8x128xf32>
    %351 = arith.mulf %350, %349 : vector<8x128xf32>
    %352 = arith.addf %348, %351 : vector<8x128xf32>
    %353 = vector.extract_strided_slice %331 {offsets = [1, 0], sizes = [8, 128], strides = [1, 1]} : vector<10x128xf32> to vector<8x128xf32>
    %cst_86 = arith.constant 0.876158595 : f32
    %354 = vector.broadcast %cst_86 : f32 to vector<8x128xf32>
    %355 = arith.mulf %354, %353 : vector<8x128xf32>
    %356 = arith.addf %352, %355 : vector<8x128xf32>
    %357 = vector.extract_strided_slice %330 {offsets = [2, 0], sizes = [8, 128], strides = [1, 1]} : vector<10x128xf32> to vector<8x128xf32>
    %cst_87 = arith.constant 0.924886405 : f32
    %358 = vector.broadcast %cst_87 : f32 to vector<8x128xf32>
    %359 = arith.mulf %358, %357 : vector<8x128xf32>
    %360 = arith.addf %356, %359 : vector<8x128xf32>
    %361 = vector.extract_strided_slice %329 {offsets = [2, 0], sizes = [8, 128], strides = [1, 1]} : vector<10x128xf32> to vector<8x128xf32>
    %cst_88 = arith.constant 0.876158595 : f32
    %362 = vector.broadcast %cst_88 : f32 to vector<8x128xf32>
    %363 = arith.mulf %362, %361 : vector<8x128xf32>
    %364 = arith.addf %360, %363 : vector<8x128xf32>
    %365 = vector.extract_strided_slice %331 {offsets = [2, 0], sizes = [8, 128], strides = [1, 1]} : vector<10x128xf32> to vector<8x128xf32>
    %cst_89 = arith.constant 0.924886405 : f32
    %366 = vector.broadcast %cst_89 : f32 to vector<8x128xf32>
    %367 = arith.mulf %366, %365 : vector<8x128xf32>
    %368 = arith.addf %364, %367 : vector<8x128xf32>
    %369 = vector.extract_strided_slice %28 {offsets = [1, 0], sizes = [8, 128], strides = [1, 1]} : vector<10x128xi32> to vector<8x128xi32>
    %370 = arith.cmpf olt, %368, %313 : vector<8x128xf32>
    %371 = arith.select %370, %368, %313 : vector<8x128xi1>, vector<8x128xf32>
    %372 = arith.select %370, %369, %314 : vector<8x128xi1>, vector<8x128xi32>
    %373 = arith.select %370, %313, %368 : vector<8x128xi1>, vector<8x128xf32>
    %374 = arith.select %370, %314, %369 : vector<8x128xi1>, vector<8x128xi32>
    %375 = arith.cmpf olt, %373, %318 : vector<8x128xf32>
    %376 = arith.select %375, %373, %318 : vector<8x128xi1>, vector<8x128xf32>
    %377 = arith.select %375, %374, %319 : vector<8x128xi1>, vector<8x128xi32>
    %378 = arith.select %375, %318, %373 : vector<8x128xi1>, vector<8x128xf32>
    %379 = arith.select %375, %319, %374 : vector<8x128xi1>, vector<8x128xi32>
    %380 = arith.cmpf olt, %378, %323 : vector<8x128xf32>
    %381 = arith.select %380, %378, %323 : vector<8x128xi1>, vector<8x128xf32>
    %382 = arith.select %380, %379, %324 : vector<8x128xi1>, vector<8x128xi32>
    %383 = vector.extract_strided_slice %25 {offsets = [2, 0], sizes = [10, 128], strides = [1, 1]} : vector<12x128xf32> to vector<10x128xf32>
    %384 = arith.subf %383, %12 : vector<10x128xf32>
    %385 = math.absf %384 : vector<10x128xf32>
    %cst_90 = arith.constant 0.000000e+00 : f32
    %386 = vector.broadcast %cst_90 : f32 to vector<10x128xf32>
    %387 = arith.select %24, %385, %386 : vector<10x128xi1>, vector<10x128xf32>
    %c1_i32_91 = arith.constant 1 : i32
    %388 = tpu.dynamic_rotate %387 by %c1_i32_91 dim 1 : vector<10x128xf32>, i32 -> vector<10x128xf32>
    %c127_i32_92 = arith.constant 127 : i32
    %389 = tpu.dynamic_rotate %387 by %c127_i32_92 dim 1 : vector<10x128xf32>, i32 -> vector<10x128xf32>
    %cst_93 = arith.constant 0.000000e+00 : f32
    %390 = vector.broadcast %cst_93 : f32 to vector<8x128xf32>
    %391 = vector.extract_strided_slice %388 {offsets = [0, 0], sizes = [8, 128], strides = [1, 1]} : vector<10x128xf32> to vector<8x128xf32>
    %cst_94 = arith.constant 0.924886405 : f32
    %392 = vector.broadcast %cst_94 : f32 to vector<8x128xf32>
    %393 = arith.mulf %392, %391 : vector<8x128xf32>
    %394 = arith.addf %390, %393 : vector<8x128xf32>
    %395 = vector.extract_strided_slice %387 {offsets = [0, 0], sizes = [8, 128], strides = [1, 1]} : vector<10x128xf32> to vector<8x128xf32>
    %cst_95 = arith.constant 0.876158595 : f32
    %396 = vector.broadcast %cst_95 : f32 to vector<8x128xf32>
    %397 = arith.mulf %396, %395 : vector<8x128xf32>
    %398 = arith.addf %394, %397 : vector<8x128xf32>
    %399 = vector.extract_strided_slice %389 {offsets = [0, 0], sizes = [8, 128], strides = [1, 1]} : vector<10x128xf32> to vector<8x128xf32>
    %cst_96 = arith.constant 0.924886405 : f32
    %400 = vector.broadcast %cst_96 : f32 to vector<8x128xf32>
    %401 = arith.mulf %400, %399 : vector<8x128xf32>
    %402 = arith.addf %398, %401 : vector<8x128xf32>
    %403 = vector.extract_strided_slice %388 {offsets = [1, 0], sizes = [8, 128], strides = [1, 1]} : vector<10x128xf32> to vector<8x128xf32>
    %cst_97 = arith.constant 0.876158595 : f32
    %404 = vector.broadcast %cst_97 : f32 to vector<8x128xf32>
    %405 = arith.mulf %404, %403 : vector<8x128xf32>
    %406 = arith.addf %402, %405 : vector<8x128xf32>
    %407 = vector.extract_strided_slice %387 {offsets = [1, 0], sizes = [8, 128], strides = [1, 1]} : vector<10x128xf32> to vector<8x128xf32>
    %cst_98 = arith.constant 0.795820057 : f32
    %408 = vector.broadcast %cst_98 : f32 to vector<8x128xf32>
    %409 = arith.mulf %408, %407 : vector<8x128xf32>
    %410 = arith.addf %406, %409 : vector<8x128xf32>
    %411 = vector.extract_strided_slice %389 {offsets = [1, 0], sizes = [8, 128], strides = [1, 1]} : vector<10x128xf32> to vector<8x128xf32>
    %cst_99 = arith.constant 0.876158595 : f32
    %412 = vector.broadcast %cst_99 : f32 to vector<8x128xf32>
    %413 = arith.mulf %412, %411 : vector<8x128xf32>
    %414 = arith.addf %410, %413 : vector<8x128xf32>
    %415 = vector.extract_strided_slice %388 {offsets = [2, 0], sizes = [8, 128], strides = [1, 1]} : vector<10x128xf32> to vector<8x128xf32>
    %cst_100 = arith.constant 0.924886405 : f32
    %416 = vector.broadcast %cst_100 : f32 to vector<8x128xf32>
    %417 = arith.mulf %416, %415 : vector<8x128xf32>
    %418 = arith.addf %414, %417 : vector<8x128xf32>
    %419 = vector.extract_strided_slice %387 {offsets = [2, 0], sizes = [8, 128], strides = [1, 1]} : vector<10x128xf32> to vector<8x128xf32>
    %cst_101 = arith.constant 0.876158595 : f32
    %420 = vector.broadcast %cst_101 : f32 to vector<8x128xf32>
    %421 = arith.mulf %420, %419 : vector<8x128xf32>
    %422 = arith.addf %418, %421 : vector<8x128xf32>
    %423 = vector.extract_strided_slice %389 {offsets = [2, 0], sizes = [8, 128], strides = [1, 1]} : vector<10x128xf32> to vector<8x128xf32>
    %cst_102 = arith.constant 0.924886405 : f32
    %424 = vector.broadcast %cst_102 : f32 to vector<8x128xf32>
    %425 = arith.mulf %424, %423 : vector<8x128xf32>
    %426 = arith.addf %422, %425 : vector<8x128xf32>
    %427 = vector.extract_strided_slice %27 {offsets = [2, 0], sizes = [8, 128], strides = [1, 1]} : vector<10x128xi32> to vector<8x128xi32>
    %428 = arith.cmpf olt, %426, %371 : vector<8x128xf32>
    %429 = arith.select %428, %426, %371 : vector<8x128xi1>, vector<8x128xf32>
    %430 = arith.select %428, %427, %372 : vector<8x128xi1>, vector<8x128xi32>
    %431 = arith.select %428, %371, %426 : vector<8x128xi1>, vector<8x128xf32>
    %432 = arith.select %428, %372, %427 : vector<8x128xi1>, vector<8x128xi32>
    %433 = arith.cmpf olt, %431, %376 : vector<8x128xf32>
    %434 = arith.select %433, %431, %376 : vector<8x128xi1>, vector<8x128xf32>
    %435 = arith.select %433, %432, %377 : vector<8x128xi1>, vector<8x128xi32>
    %436 = arith.select %433, %376, %431 : vector<8x128xi1>, vector<8x128xf32>
    %437 = arith.select %433, %377, %432 : vector<8x128xi1>, vector<8x128xi32>
    %438 = arith.cmpf olt, %436, %381 : vector<8x128xf32>
    %439 = arith.select %438, %436, %381 : vector<8x128xi1>, vector<8x128xf32>
    %440 = arith.select %438, %437, %382 : vector<8x128xi1>, vector<8x128xi32>
    %441 = vector.extract_strided_slice %11 {offsets = [2, 0], sizes = [10, 128], strides = [1, 1]} : vector<12x128xf32> to vector<10x128xf32>
    %442 = arith.subf %441, %12 : vector<10x128xf32>
    %443 = math.absf %442 : vector<10x128xf32>
    %cst_103 = arith.constant 0.000000e+00 : f32
    %444 = vector.broadcast %cst_103 : f32 to vector<10x128xf32>
    %445 = arith.select %24, %443, %444 : vector<10x128xi1>, vector<10x128xf32>
    %c1_i32_104 = arith.constant 1 : i32
    %446 = tpu.dynamic_rotate %445 by %c1_i32_104 dim 1 : vector<10x128xf32>, i32 -> vector<10x128xf32>
    %c127_i32_105 = arith.constant 127 : i32
    %447 = tpu.dynamic_rotate %445 by %c127_i32_105 dim 1 : vector<10x128xf32>, i32 -> vector<10x128xf32>
    %cst_106 = arith.constant 0.000000e+00 : f32
    %448 = vector.broadcast %cst_106 : f32 to vector<8x128xf32>
    %449 = vector.extract_strided_slice %446 {offsets = [0, 0], sizes = [8, 128], strides = [1, 1]} : vector<10x128xf32> to vector<8x128xf32>
    %cst_107 = arith.constant 0.924886405 : f32
    %450 = vector.broadcast %cst_107 : f32 to vector<8x128xf32>
    %451 = arith.mulf %450, %449 : vector<8x128xf32>
    %452 = arith.addf %448, %451 : vector<8x128xf32>
    %453 = vector.extract_strided_slice %445 {offsets = [0, 0], sizes = [8, 128], strides = [1, 1]} : vector<10x128xf32> to vector<8x128xf32>
    %cst_108 = arith.constant 0.876158595 : f32
    %454 = vector.broadcast %cst_108 : f32 to vector<8x128xf32>
    %455 = arith.mulf %454, %453 : vector<8x128xf32>
    %456 = arith.addf %452, %455 : vector<8x128xf32>
    %457 = vector.extract_strided_slice %447 {offsets = [0, 0], sizes = [8, 128], strides = [1, 1]} : vector<10x128xf32> to vector<8x128xf32>
    %cst_109 = arith.constant 0.924886405 : f32
    %458 = vector.broadcast %cst_109 : f32 to vector<8x128xf32>
    %459 = arith.mulf %458, %457 : vector<8x128xf32>
    %460 = arith.addf %456, %459 : vector<8x128xf32>
    %461 = vector.extract_strided_slice %446 {offsets = [1, 0], sizes = [8, 128], strides = [1, 1]} : vector<10x128xf32> to vector<8x128xf32>
    %cst_110 = arith.constant 0.876158595 : f32
    %462 = vector.broadcast %cst_110 : f32 to vector<8x128xf32>
    %463 = arith.mulf %462, %461 : vector<8x128xf32>
    %464 = arith.addf %460, %463 : vector<8x128xf32>
    %465 = vector.extract_strided_slice %445 {offsets = [1, 0], sizes = [8, 128], strides = [1, 1]} : vector<10x128xf32> to vector<8x128xf32>
    %cst_111 = arith.constant 0.795820057 : f32
    %466 = vector.broadcast %cst_111 : f32 to vector<8x128xf32>
    %467 = arith.mulf %466, %465 : vector<8x128xf32>
    %468 = arith.addf %464, %467 : vector<8x128xf32>
    %469 = vector.extract_strided_slice %447 {offsets = [1, 0], sizes = [8, 128], strides = [1, 1]} : vector<10x128xf32> to vector<8x128xf32>
    %cst_112 = arith.constant 0.876158595 : f32
    %470 = vector.broadcast %cst_112 : f32 to vector<8x128xf32>
    %471 = arith.mulf %470, %469 : vector<8x128xf32>
    %472 = arith.addf %468, %471 : vector<8x128xf32>
    %473 = vector.extract_strided_slice %446 {offsets = [2, 0], sizes = [8, 128], strides = [1, 1]} : vector<10x128xf32> to vector<8x128xf32>
    %cst_113 = arith.constant 0.924886405 : f32
    %474 = vector.broadcast %cst_113 : f32 to vector<8x128xf32>
    %475 = arith.mulf %474, %473 : vector<8x128xf32>
    %476 = arith.addf %472, %475 : vector<8x128xf32>
    %477 = vector.extract_strided_slice %445 {offsets = [2, 0], sizes = [8, 128], strides = [1, 1]} : vector<10x128xf32> to vector<8x128xf32>
    %cst_114 = arith.constant 0.876158595 : f32
    %478 = vector.broadcast %cst_114 : f32 to vector<8x128xf32>
    %479 = arith.mulf %478, %477 : vector<8x128xf32>
    %480 = arith.addf %476, %479 : vector<8x128xf32>
    %481 = vector.extract_strided_slice %447 {offsets = [2, 0], sizes = [8, 128], strides = [1, 1]} : vector<10x128xf32> to vector<8x128xf32>
    %cst_115 = arith.constant 0.924886405 : f32
    %482 = vector.broadcast %cst_115 : f32 to vector<8x128xf32>
    %483 = arith.mulf %482, %481 : vector<8x128xf32>
    %484 = arith.addf %480, %483 : vector<8x128xf32>
    %485 = vector.extract_strided_slice %7 {offsets = [2, 0], sizes = [8, 128], strides = [1, 1]} : vector<10x128xi32> to vector<8x128xi32>
    %486 = arith.cmpf olt, %484, %429 : vector<8x128xf32>
    %487 = arith.select %486, %484, %429 : vector<8x128xi1>, vector<8x128xf32>
    %488 = arith.select %486, %485, %430 : vector<8x128xi1>, vector<8x128xi32>
    %489 = arith.select %486, %429, %484 : vector<8x128xi1>, vector<8x128xf32>
    %490 = arith.select %486, %430, %485 : vector<8x128xi1>, vector<8x128xi32>
    %491 = arith.cmpf olt, %489, %434 : vector<8x128xf32>
    %492 = arith.select %491, %489, %434 : vector<8x128xi1>, vector<8x128xf32>
    %493 = arith.select %491, %490, %435 : vector<8x128xi1>, vector<8x128xi32>
    %494 = arith.select %491, %434, %489 : vector<8x128xi1>, vector<8x128xf32>
    %495 = arith.select %491, %435, %490 : vector<8x128xi1>, vector<8x128xi32>
    %496 = arith.cmpf olt, %494, %439 : vector<8x128xf32>
    %497 = arith.select %496, %494, %439 : vector<8x128xi1>, vector<8x128xf32>
    %498 = arith.select %496, %495, %440 : vector<8x128xi1>, vector<8x128xi32>
    %499 = vector.extract_strided_slice %26 {offsets = [2, 0], sizes = [10, 128], strides = [1, 1]} : vector<12x128xf32> to vector<10x128xf32>
    %500 = arith.subf %499, %12 : vector<10x128xf32>
    %501 = math.absf %500 : vector<10x128xf32>
    %cst_116 = arith.constant 0.000000e+00 : f32
    %502 = vector.broadcast %cst_116 : f32 to vector<10x128xf32>
    %503 = arith.select %24, %501, %502 : vector<10x128xi1>, vector<10x128xf32>
    %c1_i32_117 = arith.constant 1 : i32
    %504 = tpu.dynamic_rotate %503 by %c1_i32_117 dim 1 : vector<10x128xf32>, i32 -> vector<10x128xf32>
    %c127_i32_118 = arith.constant 127 : i32
    %505 = tpu.dynamic_rotate %503 by %c127_i32_118 dim 1 : vector<10x128xf32>, i32 -> vector<10x128xf32>
    %cst_119 = arith.constant 0.000000e+00 : f32
    %506 = vector.broadcast %cst_119 : f32 to vector<8x128xf32>
    %507 = vector.extract_strided_slice %504 {offsets = [0, 0], sizes = [8, 128], strides = [1, 1]} : vector<10x128xf32> to vector<8x128xf32>
    %cst_120 = arith.constant 0.924886405 : f32
    %508 = vector.broadcast %cst_120 : f32 to vector<8x128xf32>
    %509 = arith.mulf %508, %507 : vector<8x128xf32>
    %510 = arith.addf %506, %509 : vector<8x128xf32>
    %511 = vector.extract_strided_slice %503 {offsets = [0, 0], sizes = [8, 128], strides = [1, 1]} : vector<10x128xf32> to vector<8x128xf32>
    %cst_121 = arith.constant 0.876158595 : f32
    %512 = vector.broadcast %cst_121 : f32 to vector<8x128xf32>
    %513 = arith.mulf %512, %511 : vector<8x128xf32>
    %514 = arith.addf %510, %513 : vector<8x128xf32>
    %515 = vector.extract_strided_slice %505 {offsets = [0, 0], sizes = [8, 128], strides = [1, 1]} : vector<10x128xf32> to vector<8x128xf32>
    %cst_122 = arith.constant 0.924886405 : f32
    %516 = vector.broadcast %cst_122 : f32 to vector<8x128xf32>
    %517 = arith.mulf %516, %515 : vector<8x128xf32>
    %518 = arith.addf %514, %517 : vector<8x128xf32>
    %519 = vector.extract_strided_slice %504 {offsets = [1, 0], sizes = [8, 128], strides = [1, 1]} : vector<10x128xf32> to vector<8x128xf32>
    %cst_123 = arith.constant 0.876158595 : f32
    %520 = vector.broadcast %cst_123 : f32 to vector<8x128xf32>
    %521 = arith.mulf %520, %519 : vector<8x128xf32>
    %522 = arith.addf %518, %521 : vector<8x128xf32>
    %523 = vector.extract_strided_slice %503 {offsets = [1, 0], sizes = [8, 128], strides = [1, 1]} : vector<10x128xf32> to vector<8x128xf32>
    %cst_124 = arith.constant 0.795820057 : f32
    %524 = vector.broadcast %cst_124 : f32 to vector<8x128xf32>
    %525 = arith.mulf %524, %523 : vector<8x128xf32>
    %526 = arith.addf %522, %525 : vector<8x128xf32>
    %527 = vector.extract_strided_slice %505 {offsets = [1, 0], sizes = [8, 128], strides = [1, 1]} : vector<10x128xf32> to vector<8x128xf32>
    %cst_125 = arith.constant 0.876158595 : f32
    %528 = vector.broadcast %cst_125 : f32 to vector<8x128xf32>
    %529 = arith.mulf %528, %527 : vector<8x128xf32>
    %530 = arith.addf %526, %529 : vector<8x128xf32>
    %531 = vector.extract_strided_slice %504 {offsets = [2, 0], sizes = [8, 128], strides = [1, 1]} : vector<10x128xf32> to vector<8x128xf32>
    %cst_126 = arith.constant 0.924886405 : f32
    %532 = vector.broadcast %cst_126 : f32 to vector<8x128xf32>
    %533 = arith.mulf %532, %531 : vector<8x128xf32>
    %534 = arith.addf %530, %533 : vector<8x128xf32>
    %535 = vector.extract_strided_slice %503 {offsets = [2, 0], sizes = [8, 128], strides = [1, 1]} : vector<10x128xf32> to vector<8x128xf32>
    %cst_127 = arith.constant 0.876158595 : f32
    %536 = vector.broadcast %cst_127 : f32 to vector<8x128xf32>
    %537 = arith.mulf %536, %535 : vector<8x128xf32>
    %538 = arith.addf %534, %537 : vector<8x128xf32>
    %539 = vector.extract_strided_slice %505 {offsets = [2, 0], sizes = [8, 128], strides = [1, 1]} : vector<10x128xf32> to vector<8x128xf32>
    %cst_128 = arith.constant 0.924886405 : f32
    %540 = vector.broadcast %cst_128 : f32 to vector<8x128xf32>
    %541 = arith.mulf %540, %539 : vector<8x128xf32>
    %542 = arith.addf %538, %541 : vector<8x128xf32>
    %543 = vector.extract_strided_slice %28 {offsets = [2, 0], sizes = [8, 128], strides = [1, 1]} : vector<10x128xi32> to vector<8x128xi32>
    %544 = arith.cmpf olt, %542, %487 : vector<8x128xf32>
    %545 = arith.select %544, %542, %487 : vector<8x128xi1>, vector<8x128xf32>
    %546 = arith.select %544, %543, %488 : vector<8x128xi1>, vector<8x128xi32>
    %547 = arith.select %544, %487, %542 : vector<8x128xi1>, vector<8x128xf32>
    %548 = arith.select %544, %488, %543 : vector<8x128xi1>, vector<8x128xi32>
    %549 = arith.cmpf olt, %547, %492 : vector<8x128xf32>
    %550 = arith.select %549, %547, %492 : vector<8x128xi1>, vector<8x128xf32>
    %551 = arith.select %549, %548, %493 : vector<8x128xi1>, vector<8x128xi32>
    %552 = arith.select %549, %492, %547 : vector<8x128xi1>, vector<8x128xf32>
    %553 = arith.select %549, %493, %548 : vector<8x128xi1>, vector<8x128xi32>
    %554 = arith.cmpf olt, %552, %497 : vector<8x128xf32>
    %555 = arith.select %554, %552, %497 : vector<8x128xi1>, vector<8x128xf32>
    %556 = arith.select %554, %553, %498 : vector<8x128xi1>, vector<8x128xi32>
    %cst_129 = arith.constant 1.000000e+00 : f32
    %557 = vector.broadcast %cst_129 : f32 to vector<8x128xf32>
    %558 = arith.cmpf ogt, %545, %557 : vector<8x128xf32>
    %c5_i32 = arith.constant 5 : i32
    %559 = vector.broadcast %c5_i32 : i32 to vector<8x128xi32>
    %560 = arith.select %558, %559, %546 : vector<8x128xi1>, vector<8x128xi32>
    %cst_130 = arith.constant 1.000000e+00 : f32
    %561 = vector.broadcast %cst_130 : f32 to vector<8x128xf32>
    %562 = arith.cmpf ogt, %550, %561 : vector<8x128xf32>
    %c5_i32_131 = arith.constant 5 : i32
    %563 = vector.broadcast %c5_i32_131 : i32 to vector<8x128xi32>
    %564 = arith.select %562, %563, %551 : vector<8x128xi1>, vector<8x128xi32>
    %cst_132 = arith.constant 1.000000e+00 : f32
    %565 = vector.broadcast %cst_132 : f32 to vector<8x128xf32>
    %566 = arith.cmpf ogt, %555, %565 : vector<8x128xf32>
    %c5_i32_133 = arith.constant 5 : i32
    %567 = vector.broadcast %c5_i32_133 : i32 to vector<8x128xi32>
    %568 = arith.select %566, %567, %556 : vector<8x128xi1>, vector<8x128xi32>
    %569 = arith.cmpi eq, %560, %564 : vector<8x128xi32>
    %570 = arith.extui %569 : vector<8x128xi1> to vector<8x128xi32>
    %571 = arith.cmpi eq, %560, %568 : vector<8x128xi32>
    %572 = arith.extui %571 : vector<8x128xi1> to vector<8x128xi32>
    %573 = arith.cmpi eq, %564, %568 : vector<8x128xi32>
    %574 = arith.extui %573 : vector<8x128xi1> to vector<8x128xi32>
    %c-1_i32 = arith.constant -1 : i32
    %575 = vector.broadcast %c-1_i32 : i32 to vector<8x128xi32>
    %c0_i32_134 = arith.constant 0 : i32
    %576 = vector.broadcast %c0_i32_134 : i32 to vector<8x128xi32>
    %c1_i32_135 = arith.constant 1 : i32
    %577 = vector.broadcast %c1_i32_135 : i32 to vector<8x128xi32>
    %578 = arith.addi %577, %570 : vector<8x128xi32>
    %579 = arith.addi %578, %572 : vector<8x128xi32>
    %c5_i32_136 = arith.constant 5 : i32
    %580 = vector.broadcast %c5_i32_136 : i32 to vector<8x128xi32>
    %581 = arith.cmpi eq, %560, %580 : vector<8x128xi32>
    %c6_i32 = arith.constant 6 : i32
    %582 = vector.broadcast %c6_i32 : i32 to vector<8x128xi32>
    %583 = arith.muli %579, %582 : vector<8x128xi32>
    %584 = arith.subi %583, %560 : vector<8x128xi32>
    %c-1_i32_137 = arith.constant -1 : i32
    %585 = vector.broadcast %c-1_i32_137 : i32 to vector<8x128xi32>
    %586 = arith.select %581, %585, %584 : vector<8x128xi1>, vector<8x128xi32>
    %587 = arith.cmpi sgt, %586, %575 : vector<8x128xi32>
    %588 = arith.select %587, %560, %576 : vector<8x128xi1>, vector<8x128xi32>
    %589 = arith.select %587, %586, %575 : vector<8x128xi1>, vector<8x128xi32>
    %c1_i32_138 = arith.constant 1 : i32
    %590 = vector.broadcast %c1_i32_138 : i32 to vector<8x128xi32>
    %591 = arith.addi %590, %570 : vector<8x128xi32>
    %592 = arith.addi %591, %574 : vector<8x128xi32>
    %c5_i32_139 = arith.constant 5 : i32
    %593 = vector.broadcast %c5_i32_139 : i32 to vector<8x128xi32>
    %594 = arith.cmpi eq, %564, %593 : vector<8x128xi32>
    %c6_i32_140 = arith.constant 6 : i32
    %595 = vector.broadcast %c6_i32_140 : i32 to vector<8x128xi32>
    %596 = arith.muli %592, %595 : vector<8x128xi32>
    %597 = arith.subi %596, %564 : vector<8x128xi32>
    %c-1_i32_141 = arith.constant -1 : i32
    %598 = vector.broadcast %c-1_i32_141 : i32 to vector<8x128xi32>
    %599 = arith.select %594, %598, %597 : vector<8x128xi1>, vector<8x128xi32>
    %600 = arith.cmpi sgt, %599, %589 : vector<8x128xi32>
    %601 = arith.select %600, %564, %588 : vector<8x128xi1>, vector<8x128xi32>
    %602 = arith.select %600, %599, %589 : vector<8x128xi1>, vector<8x128xi32>
    %c1_i32_142 = arith.constant 1 : i32
    %603 = vector.broadcast %c1_i32_142 : i32 to vector<8x128xi32>
    %604 = arith.addi %603, %572 : vector<8x128xi32>
    %605 = arith.addi %604, %574 : vector<8x128xi32>
    %c5_i32_143 = arith.constant 5 : i32
    %606 = vector.broadcast %c5_i32_143 : i32 to vector<8x128xi32>
    %607 = arith.cmpi eq, %568, %606 : vector<8x128xi32>
    %c6_i32_144 = arith.constant 6 : i32
    %608 = vector.broadcast %c6_i32_144 : i32 to vector<8x128xi32>
    %609 = arith.muli %605, %608 : vector<8x128xi32>
    %610 = arith.subi %609, %568 : vector<8x128xi32>
    %c-1_i32_145 = arith.constant -1 : i32
    %611 = vector.broadcast %c-1_i32_145 : i32 to vector<8x128xi32>
    %612 = arith.select %607, %611, %610 : vector<8x128xi1>, vector<8x128xi32>
    %613 = arith.cmpi sgt, %612, %602 : vector<8x128xi32>
    %614 = arith.select %613, %568, %601 : vector<8x128xi1>, vector<8x128xi32>
    %c0_146 = arith.constant 0 : index
    %c0_147 = arith.constant 0 : index
    %c0_148 = arith.constant 0 : index
    %615 = vector.load %arg4[%c0_146, %c0_147, %c0_148] : memref<1x8x128xi32, #tpu.memory_space<vmem>>, vector<1x8x128xi32>
    %616 = vector.shape_cast %615 : vector<1x8x128xi32> to vector<8x128xi32>
    %617 = vector.shape_cast %614 : vector<8x128xi32> to vector<1x8x128xi32>
    tpu.vector_store %arg4[%c0_146, %c0_147, %c0_148], %617 {strides = array<i32>} : memref<1x8x128xi32, #tpu.memory_space<vmem>>, vector<1x8x128xi32>,
    return
  }
  func.func @transform_0(%arg0: i32, %arg1: i32) -> (i32, i32, i32) {
    %c0_i32 = arith.constant 0 : i32
    %c0_i32_0 = arith.constant 0 : i32
    %c0_i32_1 = arith.constant 0 : i32
    return %arg0, %c0_i32, %c0_i32_0 : i32, i32, i32
  }
  func.func @transform_1(%arg0: i32, %arg1: i32) -> (i32, i32, i32) {
    %c0_i32 = arith.constant 0 : i32
    %c0_i32_0 = arith.constant 0 : i32
    %c0_i32_1 = arith.constant 0 : i32
    return %arg0, %c0_i32, %c0_i32_0 : i32, i32, i32
  }
  func.func @transform_2(%arg0: i32, %arg1: i32) -> (i32, i32, i32) {
    %c0_i32 = arith.constant 0 : i32
    %c0_i32_0 = arith.constant 0 : i32
    return %arg0, %arg1, %c0_i32 : i32, i32, i32
  }
}

</mosaic_0001>

<llo_original>
// kernel: tpu_custom_call.1
$region0: #{tpu_custom_call.1}
  #allocation0 [shape = 'u32[]', space=smem, size = 0x4, offset = 0x4, fixed_abs, tag = 'smem constant byte address 0x4 - core index']
  #allocation1 [shape = 'u32[144,128]{1,0:T(1,128)}', space=vmem, size = 0x12000, scoped, tag = 'internal scratch']
  %s0 = inlined_call_operand.vmem [shape: f32[2,20,128], index: 0, kind: input, shape index: {}]
  %s1 = inlined_call_operand.vmem [shape: s32[2,18,128], index: 1, kind: input, shape index: {}]
  %s2 = inlined_call_operand.hbm [shape: s32[2,16,128], index: 2, kind: output, shape index: {}]
  %s3 = sld [smem:[#allocation0]]
  $region41: #{tpu_custom_call.1} parent=0
    _
  %s5 = ssub.s32 1, %s3
  %s6 = scalar_select 0, %s5, %s3
  $region1: #{tpu_custom_call.1} parent=0
    #allocation2 [shape = 'u8[8192]{0}', space=vmem, size = 0x2000, scoped, tag = 'output window, operand 0']
    #allocation3 [shape = 's32[2]{0}', space=sflag, size = 0x8, scoped, tag = 'scoped memory for tpu_custom_call.1']
    %7 = vsyncpa [#allocation3], 0
    %s8 = scalar_lea.sflag [#allocation3], 1
    %9 = vsyncpa %s8, 0
    loop: start=0, step=1, limit=6
    $region2: #{tpu_custom_call.1} parent=1 // loop_pre_header
      _
    $region3: #{tpu_custom_call.1} parent=1 // loop_header
      %s11 = sphi 0, %s15
      %p12 = scmp.ge.s32.totalorder %s11, 6
      %s18 = sphi 0, %s30
      %s19 = sphi 0, %s26
      %s20 = sphi 0, %s18
      %s21 = sphi 0, %s19
      %s22 = sphi 0, %s20
      %s23 = sphi 0, %s21
      %s33 = sphi 0, %s35
      %s36 = sphi 0, %s33
      %s37 = sphi 0, %s36
      %s53 = sphi 0, %s37
      %s59 = sphi 0, %s61
      %s62 = sphi 0, %s59
      %s63 = sphi 0, %s62
      %s79 = sphi 0, %s63
      %s87 = sphi 0, %s89
      %s90 = sphi 0, %s87
      %s91 = sphi 0, %s90
      %s107 = sphi 0, %s91
    $region4: #{tpu_custom_call.1} parent=1 // loop_header_branch
      %14 = sbr.rel (%p12) target = $region8
    $region5: #{tpu_custom_call.1} parent=1 // loop_body
      %s16 = ssub.s32 %s11, 1
      %s17 = ssub.s32 %s11, 2
      %s24 = sadd.s32 1, %s19
      %p25 = scmp.ge.s32.totalorder %s24, 2
      %s26 = scalar_select %p25, 0, %s24
      %s27 = sadd.s32 1, %s18
      %s28 = scalar_select %p25, %s27, %s18
      %p29 = scmp.ge.s32.totalorder %s28, 2
      %s30 = scalar_select %p29, 0, %s28
      %s31 = ssub.s32 %s18, %s30
      %p32 = scmp.eq.s32.totalorder %s31, 0
      %s34 = sadd.s32 %s33, 1
      %s35 = scalar_select %p32, %s33, %s34
      %p38 = pneg %p32
      %p39 = scmp.eq.s32.totalorder %s11, 3
      %p40 = por %p38, %p39
      %p41 = scmp.ne.s32.totalorder %s33, %s36
      %p42 = scmp.eq.s32.totalorder %s11, 0
      %p43 = por %p41, %p42
      %p44 = scmp.ne.s32.totalorder %s33, %s36
      %p45 = scmp.eq.s32.totalorder %s16, 3
      %p46 = por %p44, %p45
      %p47 = scmp.ne.s32.totalorder %s36, %s37
      %p48 = scmp.eq.s32.totalorder %s16, 0
      %p49 = por %p47, %p48
      %p50 = scmp.ne.s32.totalorder %s36, %s37
      %p51 = scmp.eq.s32.totalorder %s17, 3
      %p52 = por %p50, %p51
      %p54 = scmp.ne.s32.totalorder %s37, %s53
      %p55 = scmp.eq.s32.totalorder %s17, 0
      %p56 = por %p54, %p55
      %s57 = ssub.s32 %s18, %s30
      %p58 = scmp.eq.s32.totalorder %s57, 0
      %s60 = sadd.s32 %s59, 1
      %s61 = scalar_select %p58, %s59, %s60
      %p64 = pneg %p58
      %p65 = scmp.eq.s32.totalorder %s11, 3
      %p66 = por %p64, %p65
      %p67 = scmp.ne.s32.totalorder %s59, %s62
      %p68 = scmp.eq.s32.totalorder %s11, 0
      %p69 = por %p67, %p68
      %p70 = scmp.ne.s32.totalorder %s59, %s62
      %p71 = scmp.eq.s32.totalorder %s16, 3
      %p72 = por %p70, %p71
      %p73 = scmp.ne.s32.totalorder %s62, %s63
      %p74 = scmp.eq.s32.totalorder %s16, 0
      %p75 = por %p73, %p74
      %p76 = scmp.ne.s32.totalorder %s62, %s63
      %p77 = scmp.eq.s32.totalorder %s17, 3
      %p78 = por %p76, %p77
      %p80 = scmp.ne.s32.totalorder %s63, %s79
      %p81 = scmp.eq.s32.totalorder %s17, 0
      %p82 = por %p80, %p81
      %s83 = ssub.s32 %s18, %s30
      %s84 = ssub.s32 %s19, %s26
      %s85 = sor.u32 %s83, %s84
      %p86 = scmp.eq.s32.totalorder %s85, 0
      %s88 = sadd.s32 %s87, 1
      %s89 = scalar_select %p86, %s87, %s88
      %p92 = pneg %p86
      %p93 = scmp.eq.s32.totalorder %s11, 3
      %p94 = por %p92, %p93
      %p95 = scmp.ne.s32.totalorder %s87, %s90
      %p96 = scmp.eq.s32.totalorder %s11, 0
      %p97 = por %p95, %p96
      %p98 = scmp.ne.s32.totalorder %s87, %s90
      %p99 = scmp.eq.s32.totalorder %s16, 3
      %p100 = por %p98, %p99
      %p101 = scmp.ne.s32.totalorder %s90, %s91
      %p102 = scmp.eq.s32.totalorder %s16, 0
      %p103 = por %p101, %p102
      %p104 = scmp.ne.s32.totalorder %s90, %s91
      %p105 = scmp.eq.s32.totalorder %s17, 3
      %p106 = por %p104, %p105
      %p108 = scmp.ne.s32.totalorder %s91, %s107
      %p109 = scmp.eq.s32.totalorder %s17, 0
      %p110 = por %p108, %p109
      %p111 = scmp.le.s32.totalorder 1, %s11
      %p112 = scmp.lt.s32.totalorder %s11, 5
      %p113 = pnand %p111, %p112
      %p114 = pneg %p113
      // Predicated region
      $region9: #{tpu_custom_call.1} parent=5 // pred_check
        _
      $region10: #{tpu_custom_call.1} parent=5 // pred_check_branch
        %116 = sbr.rel (%p113) target = $region12
      $region11: #{tpu_custom_call.1} parent=5 // pred_region
        %s117 = ssub.s32 %s11, 1
      $region12: #{tpu_custom_call.1} parent=5 // pred_fallthru
        _
      %p118 = scmp.lt.s32.totalorder %s11, 4
      // Predicated region
      $region13: #{tpu_custom_call.1} parent=5 // pred_check
        %p119 = pneg %p118
      $region14: #{tpu_custom_call.1} parent=5 // pred_check_branch
        %121 = sbr.rel (%p119) target = $region16
      $region15: #{tpu_custom_call.1} parent=5 // pred_region
        // Predicated region
        $region17: #{tpu_custom_call.1} parent=15 // pred_check
          %p122 = pneg %p43
        $region18: #{tpu_custom_call.1} parent=15 // pred_check_branch
          %124 = sbr.rel (%p122) target = $region20
        $region19: #{tpu_custom_call.1} parent=15 // pred_region
          %p125 = scmp.lt.s32.totalorder %s18, 1
          %s126 = scalar_select %p125, %s18, 1
          %s127 = smul.addr %s126, 3
          %s128 = smul.addr %s127, 8
          %s129 = scalar_lea.vmem %s0, %s128
        $region20: #{tpu_custom_call.1} parent=15 // pred_fallthru
          _
        // Predicated region
        $region21: #{tpu_custom_call.1} parent=15 // pred_check
          %p130 = pneg %p69
        $region22: #{tpu_custom_call.1} parent=15 // pred_check_branch
          %132 = sbr.rel (%p130) target = $region24
        $region23: #{tpu_custom_call.1} parent=15 // pred_region
          %p133 = scmp.lt.s32.totalorder %s18, 1
          %s134 = scalar_select %p133, %s18, 1
          %s135 = smul.addr %s134, 3
          %s136 = smul.addr %s135, 8
          %s137 = scalar_lea.vmem %s1, %s136
        $region24: #{tpu_custom_call.1} parent=15 // pred_fallthru
          _
      $region16: #{tpu_custom_call.1} parent=5 // pred_fallthru
        _
      %p138 = scmp.le.s32.totalorder 1, %s11
      %p139 = scmp.lt.s32.totalorder %s11, 5
      %p140 = pnand %p138, %p139
      %p141 = pneg %p140
      // Predicated region
      $region25: #{tpu_custom_call.1} parent=5 // pred_check
        _
      $region26: #{tpu_custom_call.1} parent=5 // pred_check_branch
        %143 = sbr.rel (%p140) target = $region28
      $region27: #{tpu_custom_call.1} parent=5 // pred_region
        %s144 = ssub.s32 %s11, 1
        %p145 = scmp.lt.s32.totalorder %s20, 1
        %s146 = scalar_select %p145, %s20, 1
        %s147 = smul.addr %s146, 3
        %s148 = smul.addr %s147, 8
        %s149 = scalar_lea.vmem %s0, %s148
        %p150 = pneg %p49
        %p151 = pneg %p46
        %p152 = scmp.lt.s32.totalorder %s20, 1
        %s153 = scalar_select %p152, %s20, 1
        %s154 = smul.addr %s153, 3
        %s155 = smul.addr %s154, 8
        %s156 = scalar_lea.vmem %s1, %s155
        %p157 = pneg %p75
        %p158 = pneg %p72
        %p159 = pneg %p103
        %p160 = pneg %p100
        %s161 = sand.u32 %s90, 1
        %s162 = scalar_lea.sflag [#allocation3], %s161
        %s163 = sand.u32 %s90, 1
        %s164 = smul.addr %s163, 8
        %s165 = scalar_lea.vmem [#allocation2], %s164
        %p166 = scmp.lt.s32.totalorder %s20, 1
        %s167 = scalar_select %p166, %s20, 1
        %s168 = smul.addr %s167, 3
        %s169 = smul.addr %s168, 8
        %s170 = scalar_lea.vmem %s0, %s169
        %p171 = scmp.lt.s32.totalorder %s20, 1
        %s172 = scalar_select %p171, %s20, 1
        %s173 = smul.addr %s172, 3
        %s174 = smul.addr %s173, 8
        %s175 = scalar_lea.vmem %s1, %s174
        %s176 = smul.u32 %s21, 8
        %s177 = scalar_lea.vmem %s170, %s176
        %v178 = vld [vmem:[%s177] sm:$0xff]
        %v179 = vld [vmem:[%s177 + $0x8] sm:$0xf]
        %s180 = scalar_lea.vmem %s175, %s176
        %v181 = vld [vmem:[%s180] sm:$0xff]
        %v182 = vld [vmem:[%s180 + $0x8] sm:$0x3]
        %vm183 = vcmp.lt.f32.partialorder %v178, 0.0
        %vm184 = vcmp.lt.f32.partialorder %v179, 0.0
        %v185 = vsel %vm183, inf, %v178
        %v186 = vsel %vm184, inf, %v179
        %v187 = vlaneseq
        %v188 = vshrl.u32 %v187, 7
        %v189 = vadd.s32 %v188, 8
        %v190 = vstv %s176
        %v191 = vadd.s32 %v190, %v188
        %v192 = vadd.s32 %v190, %v189
        %v193 = vlaneseq
        %v194 = vand.u32 %v193, 127
        %vm195 = vcmp.ge.s32.totalorder %v191, 1
        %vm196 = vcmp.ge.s32.totalorder %v192, 1
        %vm197 = vcmp.lt.s32.totalorder %v191, 17
        %vm198 = vcmp.lt.s32.totalorder %v192, 17
        %vm199 = vmand %vm195, %vm197
        %vm200 = vmand %vm196, %vm198
        %vm201 = vcmp.lt.s32.totalorder %v194, 16
        %vm202 = vmand %vm199, %vm201
        %vm203 = vmand %vm200, %vm201
        %204 = vrot.lane.b32.xlu0 %v185, 1
        %v205 = vpop.permute.xlu0 %204
        %206 = vrot.lane.b32.xlu0 %v186, 1
        %v207 = vpop.permute.xlu0 %206
        %208 = vrot.lane.b32.xlu0 %v185, 127
        %v209 = vpop.permute.xlu0 %208
        %210 = vrot.lane.b32.xlu0 %v186, 127
        %v211 = vpop.permute.xlu0 %210
        %212 = vrot.lane.b32.xlu0 %v181, 1
        %v213 = vpop.permute.xlu0 %212
        %214 = vrot.lane.b32.xlu0 %v182, 1
        %v215 = vpop.permute.xlu0 %214
        %216 = vrot.lane.b32.xlu0 %v181, 127
        %v217 = vpop.permute.xlu0 %216
        %218 = vrot.lane.b32.xlu0 %v182, 127
        %v219 = vpop.permute.xlu0 %218
        %vm222 = vcmask 1046528
        %v223 = vrot.slane %v178, 1
        %v224 = vrot.slane %v179, 1
        %v225 = vsel %vm222, %v223, %v224
        %v228 = vsub.f32 %v205, %v225
        %v229 = vsub.f32 %v207, %v224
        %v230 = vand.u32 2147483647, %v228
        %v231 = vand.u32 2147483647, %v229
        %v232 = vsel %vm202, %v230, 0.0
        %v233 = vsel %vm203, %v231, 0.0
        %234 = vrot.lane.b32.xlu0 %v232, 1
        %v235 = vpop.permute.xlu0 %234
        %236 = vrot.lane.b32.xlu0 %v233, 1
        %v237 = vpop.permute.xlu0 %236
        %238 = vrot.lane.b32.xlu0 %v232, 127
        %v239 = vpop.permute.xlu0 %238
        %240 = vrot.lane.b32.xlu0 %v233, 127
        %v241 = vpop.permute.xlu0 %240
        %v242 = vmul.f32 %v235, 0.9248864
        %v243 = vadd.f32 %v242, 0.0
        %v244 = vmul.f32 %v232, 0.8761586
        %v245 = vadd.f32 %v243, %v244
        %v246 = vmul.f32 %v239, 0.9248864
        %v247 = vadd.f32 %v245, %v246
        %v248 = vmul.f32 %v235, 0.8761586
        %v249 = vmul.f32 %v237, 0.8761586
        %v252 = vrot.slane %v248, 1
        %v253 = vrot.slane %v249, 1
        %v254 = vsel %vm222, %v252, %v253
        %v256 = vadd.f32 %v247, %v254
        %v257 = vmul.f32 %v232, 0.79582006
        %v258 = vmul.f32 %v233, 0.79582006
        %v261 = vrot.slane %v257, 1
        %v262 = vrot.slane %v258, 1
        %v263 = vsel %vm222, %v261, %v262
        %v265 = vadd.f32 %v256, %v263
        %v266 = vmul.f32 %v239, 0.8761586
        %v267 = vmul.f32 %v241, 0.8761586
        %v270 = vrot.slane %v266, 1
        %v271 = vrot.slane %v267, 1
        %v272 = vsel %vm222, %v270, %v271
        %v274 = vadd.f32 %v265, %v272
        %v275 = vmul.f32 %v237, 0.9248864
        %vm278 = vcmask 1045504
        %v279 = vrot.slane %v242, 2
        %v280 = vrot.slane %v275, 2
        %v281 = vsel %vm278, %v279, %v280
        %v283 = vadd.f32 %v274, %v281
        %v284 = vmul.f32 %v233, 0.8761586
        %v287 = vrot.slane %v244, 2
        %v288 = vrot.slane %v284, 2
        %v289 = vsel %vm278, %v287, %v288
        %v291 = vadd.f32 %v283, %v289
        %v292 = vmul.f32 %v241, 0.9248864
        %v295 = vrot.slane %v246, 2
        %v296 = vrot.slane %v292, 2
        %v297 = vsel %vm278, %v295, %v296
        %v299 = vadd.f32 %v291, %v297
        %vm300 = vcmp.lt.f32.partialorder %v299, inf
        %v301 = vsel %vm300, %v299, inf
        %v302 = vsel %vm300, %v213, 0
        %v303 = vsel %vm300, inf, %v299
        %v304 = vsel %vm300, 0, %v213
        %vm305 = vcmp.lt.f32.partialorder %v303, inf
        %v306 = vsel %vm305, %v303, inf
        %v307 = vsel %vm305, %v304, 0
        %v308 = vsel %vm305, inf, %v303
        %v309 = vsel %vm305, 0, %v304
        %vm310 = vcmp.lt.f32.partialorder %v308, inf
        %v311 = vsel %vm310, %v308, inf
        %v312 = vsel %vm310, %v309, 0
        %v313 = vsub.f32 %v185, %v225
        %v314 = vsub.f32 %v186, %v224
        %v315 = vand.u32 2147483647, %v313
        %v316 = vand.u32 2147483647, %v314
        %v317 = vsel %vm202, %v315, 0.0
        %v318 = vsel %vm203, %v316, 0.0
        %319 = vrot.lane.b32.xlu0 %v317, 1
        %v320 = vpop.permute.xlu0 %319
        %321 = vrot.lane.b32.xlu0 %v318, 1
        %v322 = vpop.permute.xlu0 %321
        %323 = vrot.lane.b32.xlu0 %v317, 127
        %v324 = vpop.permute.xlu0 %323
        %325 = vrot.lane.b32.xlu0 %v318, 127
        %v326 = vpop.permute.xlu0 %325
        %v327 = vmul.f32 %v320, 0.9248864
        %v328 = vadd.f32 %v327, 0.0
        %v329 = vmul.f32 %v317, 0.8761586
        %v330 = vadd.f32 %v328, %v329
        %v331 = vmul.f32 %v324, 0.9248864
        %v332 = vadd.f32 %v330, %v331
        %v333 = vmul.f32 %v320, 0.8761586
        %v334 = vmul.f32 %v322, 0.8761586
        %v337 = vrot.slane %v333, 1
        %v338 = vrot.slane %v334, 1
        %v339 = vsel %vm222, %v337, %v338
        %v341 = vadd.f32 %v332, %v339
        %v342 = vmul.f32 %v317, 0.79582006
        %v343 = vmul.f32 %v318, 0.79582006
        %v346 = vrot.slane %v342, 1
        %v347 = vrot.slane %v343, 1
        %v348 = vsel %vm222, %v346, %v347
        %v350 = vadd.f32 %v341, %v348
        %v351 = vmul.f32 %v324, 0.8761586
        %v352 = vmul.f32 %v326, 0.8761586
        %v355 = vrot.slane %v351, 1
        %v356 = vrot.slane %v352, 1
        %v357 = vsel %vm222, %v355, %v356
        %v359 = vadd.f32 %v350, %v357
        %v360 = vmul.f32 %v322, 0.9248864
        %v363 = vrot.slane %v327, 2
        %v364 = vrot.slane %v360, 2
        %v365 = vsel %vm278, %v363, %v364
        %v367 = vadd.f32 %v359, %v365
        %v368 = vmul.f32 %v318, 0.8761586
        %v371 = vrot.slane %v329, 2
        %v372 = vrot.slane %v368, 2
        %v373 = vsel %vm278, %v371, %v372
        %v375 = vadd.f32 %v367, %v373
        %v376 = vmul.f32 %v326, 0.9248864
        %v379 = vrot.slane %v331, 2
        %v380 = vrot.slane %v376, 2
        %v381 = vsel %vm278, %v379, %v380
        %v383 = vadd.f32 %v375, %v381
        %vm384 = vcmp.lt.f32.partialorder %v383, %v301
        %v385 = vsel %vm384, %v383, %v301
        %v386 = vsel %vm384, %v181, %v302
        %v387 = vsel %vm384, %v301, %v383
        %v388 = vsel %vm384, %v302, %v181
        %vm389 = vcmp.lt.f32.partialorder %v387, %v306
        %v390 = vsel %vm389, %v387, %v306
        %v391 = vsel %vm389, %v388, %v307
        %v392 = vsel %vm389, %v306, %v387
        %v393 = vsel %vm389, %v307, %v388
        %vm394 = vcmp.lt.f32.partialorder %v392, %v311
        %v395 = vsel %vm394, %v392, %v311
        %v396 = vsel %vm394, %v393, %v312
        %v397 = vsub.f32 %v209, %v225
        %v398 = vsub.f32 %v211, %v224
        %v399 = vand.u32 2147483647, %v397
        %v400 = vand.u32 2147483647, %v398
        %v401 = vsel %vm202, %v399, 0.0
        %v402 = vsel %vm203, %v400, 0.0
        %403 = vrot.lane.b32.xlu0 %v401, 1
        %v404 = vpop.permute.xlu0 %403
        %405 = vrot.lane.b32.xlu0 %v402, 1
        %v406 = vpop.permute.xlu0 %405
        %407 = vrot.lane.b32.xlu0 %v401, 127
        %v408 = vpop.permute.xlu0 %407
        %409 = vrot.lane.b32.xlu0 %v402, 127
        %v410 = vpop.permute.xlu0 %409
        %v411 = vmul.f32 %v404, 0.9248864
        %v412 = vadd.f32 %v411, 0.0
        %v413 = vmul.f32 %v401, 0.8761586
        %v414 = vadd.f32 %v412, %v413
        %v415 = vmul.f32 %v408, 0.9248864
        %v416 = vadd.f32 %v414, %v415
        %v417 = vmul.f32 %v404, 0.8761586
        %v418 = vmul.f32 %v406, 0.8761586
        %v421 = vrot.slane %v417, 1
        %v422 = vrot.slane %v418, 1
        %v423 = vsel %vm222, %v421, %v422
        %v425 = vadd.f32 %v416, %v423
        %v426 = vmul.f32 %v401, 0.79582006
        %v427 = vmul.f32 %v402, 0.79582006
        %v430 = vrot.slane %v426, 1
        %v431 = vrot.slane %v427, 1
        %v432 = vsel %vm222, %v430, %v431
        %v434 = vadd.f32 %v425, %v432
        %v435 = vmul.f32 %v408, 0.8761586
        %v436 = vmul.f32 %v410, 0.8761586
        %v439 = vrot.slane %v435, 1
        %v440 = vrot.slane %v436, 1
        %v441 = vsel %vm222, %v439, %v440
        %v443 = vadd.f32 %v434, %v441
        %v444 = vmul.f32 %v406, 0.9248864
        %v447 = vrot.slane %v411, 2
        %v448 = vrot.slane %v444, 2
        %v449 = vsel %vm278, %v447, %v448
        %v451 = vadd.f32 %v443, %v449
        %v452 = vmul.f32 %v402, 0.8761586
        %v455 = vrot.slane %v413, 2
        %v456 = vrot.slane %v452, 2
        %v457 = vsel %vm278, %v455, %v456
        %v459 = vadd.f32 %v451, %v457
        %v460 = vmul.f32 %v410, 0.9248864
        %v463 = vrot.slane %v415, 2
        %v464 = vrot.slane %v460, 2
        %v465 = vsel %vm278, %v463, %v464
        %v467 = vadd.f32 %v459, %v465
        %vm468 = vcmp.lt.f32.partialorder %v467, %v385
        %v469 = vsel %vm468, %v467, %v385
        %v470 = vsel %vm468, %v217, %v386
        %v471 = vsel %vm468, %v385, %v467
        %v472 = vsel %vm468, %v386, %v217
        %vm473 = vcmp.lt.f32.partialorder %v471, %v390
        %v474 = vsel %vm473, %v471, %v390
        %v475 = vsel %vm473, %v472, %v391
        %v476 = vsel %vm473, %v390, %v471
        %v477 = vsel %vm473, %v391, %v472
        %vm478 = vcmp.lt.f32.partialorder %v476, %v395
        %v479 = vsel %vm478, %v476, %v395
        %v480 = vsel %vm478, %v477, %v396
        %v481 = vsub.f32 %v205, %v178
        %v482 = vsub.f32 %v207, %v179
        %v483 = vand.u32 2147483647, %v481
        %v484 = vand.u32 2147483647, %v482
        %v487 = vrot.slane %v483, 1
        %v488 = vrot.slane %v484, 1
        %v489 = vsel %vm222, %v487, %v488
        %v492 = vsel %vm202, %v489, 0.0
        %v493 = vsel %vm203, %v488, 0.0
        %494 = vrot.lane.b32.xlu0 %v492, 1
        %v495 = vpop.permute.xlu0 %494
        %496 = vrot.lane.b32.xlu0 %v493, 1
        %v497 = vpop.permute.xlu0 %496
        %498 = vrot.lane.b32.xlu0 %v492, 127
        %v499 = vpop.permute.xlu0 %498
        %500 = vrot.lane.b32.xlu0 %v493, 127
        %v501 = vpop.permute.xlu0 %500
        %v502 = vmul.f32 %v495, 0.9248864
        %v503 = vadd.f32 %v502, 0.0
        %v504 = vmul.f32 %v492, 0.8761586
        %v505 = vadd.f32 %v503, %v504
        %v506 = vmul.f32 %v499, 0.9248864
        %v507 = vadd.f32 %v505, %v506
        %v508 = vmul.f32 %v495, 0.8761586
        %v509 = vmul.f32 %v497, 0.8761586
        %v512 = vrot.slane %v508, 1
        %v513 = vrot.slane %v509, 1
        %v514 = vsel %vm222, %v512, %v513
        %v516 = vadd.f32 %v507, %v514
        %v517 = vmul.f32 %v492, 0.79582006
        %v518 = vmul.f32 %v493, 0.79582006
        %v521 = vrot.slane %v517, 1
        %v522 = vrot.slane %v518, 1
        %v523 = vsel %vm222, %v521, %v522
        %v525 = vadd.f32 %v516, %v523
        %v526 = vmul.f32 %v499, 0.8761586
        %v527 = vmul.f32 %v501, 0.8761586
        %v530 = vrot.slane %v526, 1
        %v531 = vrot.slane %v527, 1
        %v532 = vsel %vm222, %v530, %v531
        %v534 = vadd.f32 %v525, %v532
        %v535 = vmul.f32 %v497, 0.9248864
        %v538 = vrot.slane %v502, 2
        %v539 = vrot.slane %v535, 2
        %v540 = vsel %vm278, %v538, %v539
        %v542 = vadd.f32 %v534, %v540
        %v543 = vmul.f32 %v493, 0.8761586
        %v546 = vrot.slane %v504, 2
        %v547 = vrot.slane %v543, 2
        %v548 = vsel %vm278, %v546, %v547
        %v550 = vadd.f32 %v542, %v548
        %v551 = vmul.f32 %v501, 0.9248864
        %v554 = vrot.slane %v506, 2
        %v555 = vrot.slane %v551, 2
        %v556 = vsel %vm278, %v554, %v555
        %v558 = vadd.f32 %v550, %v556
        %vm559 = vcmp.lt.f32.partialorder %v558, %v469
        %v560 = vsel %vm559, %v558, %v469
        %v561 = vrot.slane %v213, 1
        %v562 = vrot.slane %v215, 1
        %v563 = vsel %vm222, %v561, %v562
        %v564 = vsel %vm559, %v563, %v470
        %v565 = vsel %vm559, %v469, %v558
        %v566 = vsel %vm559, %v470, %v563
        %vm567 = vcmp.lt.f32.partialorder %v565, %v474
        %v568 = vsel %vm567, %v565, %v474
        %v569 = vsel %vm567, %v566, %v475
        %v570 = vsel %vm567, %v474, %v565
        %v571 = vsel %vm567, %v475, %v566
        %vm572 = vcmp.lt.f32.partialorder %v570, %v479
        %v573 = vsel %vm572, %v570, %v479
        %v574 = vsel %vm572, %v571, %v480
        %v575 = vsub.f32 %v185, %v178
        %v576 = vsub.f32 %v186, %v179
        %v577 = vand.u32 2147483647, %v575
        %v578 = vand.u32 2147483647, %v576
        %v581 = vrot.slane %v577, 1
        %v582 = vrot.slane %v578, 1
        %v583 = vsel %vm222, %v581, %v582
        %v586 = vsel %vm202, %v583, 0.0
        %v587 = vsel %vm203, %v582, 0.0
        %588 = vrot.lane.b32.xlu0 %v586, 1
        %v589 = vpop.permute.xlu0 %588
        %590 = vrot.lane.b32.xlu0 %v587, 1
        %v591 = vpop.permute.xlu0 %590
        %592 = vrot.lane.b32.xlu0 %v586, 127
        %v593 = vpop.permute.xlu0 %592
        %594 = vrot.lane.b32.xlu0 %v587, 127
        %v595 = vpop.permute.xlu0 %594
        %v596 = vmul.f32 %v589, 0.9248864
        %v597 = vadd.f32 %v596, 0.0
        %v598 = vmul.f32 %v586, 0.8761586
        %v599 = vadd.f32 %v597, %v598
        %v600 = vmul.f32 %v593, 0.9248864
        %v601 = vadd.f32 %v599, %v600
        %v602 = vmul.f32 %v589, 0.8761586
        %v603 = vmul.f32 %v591, 0.8761586
        %v606 = vrot.slane %v602, 1
        %v607 = vrot.slane %v603, 1
        %v608 = vsel %vm222, %v606, %v607
        %v610 = vadd.f32 %v601, %v608
        %v611 = vmul.f32 %v586, 0.79582006
        %v612 = vmul.f32 %v587, 0.79582006
        %v615 = vrot.slane %v611, 1
        %v616 = vrot.slane %v612, 1
        %v617 = vsel %vm222, %v615, %v616
        %v619 = vadd.f32 %v610, %v617
        %v620 = vmul.f32 %v593, 0.8761586
        %v621 = vmul.f32 %v595, 0.8761586
        %v624 = vrot.slane %v620, 1
        %v625 = vrot.slane %v621, 1
        %v626 = vsel %vm222, %v624, %v625
        %v628 = vadd.f32 %v619, %v626
        %v629 = vmul.f32 %v591, 0.9248864
        %v632 = vrot.slane %v596, 2
        %v633 = vrot.slane %v629, 2
        %v634 = vsel %vm278, %v632, %v633
        %v636 = vadd.f32 %v628, %v634
        %v637 = vmul.f32 %v587, 0.8761586
        %v640 = vrot.slane %v598, 2
        %v641 = vrot.slane %v637, 2
        %v642 = vsel %vm278, %v640, %v641
        %v644 = vadd.f32 %v636, %v642
        %v645 = vmul.f32 %v595, 0.9248864
        %v648 = vrot.slane %v600, 2
        %v649 = vrot.slane %v645, 2
        %v650 = vsel %vm278, %v648, %v649
        %v652 = vadd.f32 %v644, %v650
        %vm653 = vcmp.lt.f32.partialorder %v652, %v560
        %v654 = vsel %vm653, %v652, %v560
        %v655 = vrot.slane %v181, 1
        %v656 = vrot.slane %v182, 1
        %v657 = vsel %vm222, %v655, %v656
        %v658 = vsel %vm653, %v657, %v564
        %v659 = vsel %vm653, %v560, %v652
        %v660 = vsel %vm653, %v564, %v657
        %vm661 = vcmp.lt.f32.partialorder %v659, %v568
        %v662 = vsel %vm661, %v659, %v568
        %v663 = vsel %vm661, %v660, %v569
        %v664 = vsel %vm661, %v568, %v659
        %v665 = vsel %vm661, %v569, %v660
        %vm666 = vcmp.lt.f32.partialorder %v664, %v573
        %v667 = vsel %vm666, %v664, %v573
        %v668 = vsel %vm666, %v665, %v574
        %v669 = vsub.f32 %v209, %v178
        %v670 = vsub.f32 %v211, %v179
        %v671 = vand.u32 2147483647, %v669
        %v672 = vand.u32 2147483647, %v670
        %v675 = vrot.slane %v671, 1
        %v676 = vrot.slane %v672, 1
        %v677 = vsel %vm222, %v675, %v676
        %v680 = vsel %vm202, %v677, 0.0
        %v681 = vsel %vm203, %v676, 0.0
        %682 = vrot.lane.b32.xlu0 %v680, 1
        %v683 = vpop.permute.xlu0 %682
        %684 = vrot.lane.b32.xlu0 %v681, 1
        %v685 = vpop.permute.xlu0 %684
        %686 = vrot.lane.b32.xlu0 %v680, 127
        %v687 = vpop.permute.xlu0 %686
        %688 = vrot.lane.b32.xlu0 %v681, 127
        %v689 = vpop.permute.xlu0 %688
        %v690 = vmul.f32 %v683, 0.9248864
        %v691 = vadd.f32 %v690, 0.0
        %v692 = vmul.f32 %v680, 0.8761586
        %v693 = vadd.f32 %v691, %v692
        %v694 = vmul.f32 %v687, 0.9248864
        %v695 = vadd.f32 %v693, %v694
        %v696 = vmul.f32 %v683, 0.8761586
        %v697 = vmul.f32 %v685, 0.8761586
        %v700 = vrot.slane %v696, 1
        %v701 = vrot.slane %v697, 1
        %v702 = vsel %vm222, %v700, %v701
        %v704 = vadd.f32 %v695, %v702
        %v705 = vmul.f32 %v680, 0.79582006
        %v706 = vmul.f32 %v681, 0.79582006
        %v709 = vrot.slane %v705, 1
        %v710 = vrot.slane %v706, 1
        %v711 = vsel %vm222, %v709, %v710
        %v713 = vadd.f32 %v704, %v711
        %v714 = vmul.f32 %v687, 0.8761586
        %v715 = vmul.f32 %v689, 0.8761586
        %v718 = vrot.slane %v714, 1
        %v719 = vrot.slane %v715, 1
        %v720 = vsel %vm222, %v718, %v719
        %v722 = vadd.f32 %v713, %v720
        %v723 = vmul.f32 %v685, 0.9248864
        %v726 = vrot.slane %v690, 2
        %v727 = vrot.slane %v723, 2
        %v728 = vsel %vm278, %v726, %v727
        %v730 = vadd.f32 %v722, %v728
        %v731 = vmul.f32 %v681, 0.8761586
        %v734 = vrot.slane %v692, 2
        %v735 = vrot.slane %v731, 2
        %v736 = vsel %vm278, %v734, %v735
        %v738 = vadd.f32 %v730, %v736
        %v739 = vmul.f32 %v689, 0.9248864
        %v742 = vrot.slane %v694, 2
        %v743 = vrot.slane %v739, 2
        %v744 = vsel %vm278, %v742, %v743
        %v746 = vadd.f32 %v738, %v744
        %vm747 = vcmp.lt.f32.partialorder %v746, %v654
        %v748 = vsel %vm747, %v746, %v654
        %v749 = vrot.slane %v217, 1
        %v750 = vrot.slane %v219, 1
        %v751 = vsel %vm222, %v749, %v750
        %v752 = vsel %vm747, %v751, %v658
        %v753 = vsel %vm747, %v654, %v746
        %v754 = vsel %vm747, %v658, %v751
        %vm755 = vcmp.lt.f32.partialorder %v753, %v662
        %v756 = vsel %vm755, %v753, %v662
        %v757 = vsel %vm755, %v754, %v663
        %v758 = vsel %vm755, %v662, %v753
        %v759 = vsel %vm755, %v663, %v754
        %vm760 = vcmp.lt.f32.partialorder %v758, %v667
        %v761 = vsel %vm760, %v758, %v667
        %v762 = vsel %vm760, %v759, %v668
        %vm763 = vcmask 1040384
        %v764 = vrot.slane %v178, 7
        %v765 = vrot.slane %v179, 7
        %v766 = vsel %vm763, %v764, %v765
        %v769 = vsub.f32 %v205, %v764
        %v770 = vsub.f32 %v207, %v766
        %v771 = vand.u32 2147483647, %v769
        %v772 = vand.u32 2147483647, %v770
        %v775 = vrot.slane %v771, 2
        %v776 = vrot.slane %v772, 2
        %v777 = vsel %vm278, %v775, %v776
        %v780 = vsel %vm202, %v777, 0.0
        %v781 = vsel %vm203, %v776, 0.0
        %782 = vrot.lane.b32.xlu0 %v780, 1
        %v783 = vpop.permute.xlu0 %782
        %784 = vrot.lane.b32.xlu0 %v781, 1
        %v785 = vpop.permute.xlu0 %784
        %786 = vrot.lane.b32.xlu0 %v780, 127
        %v787 = vpop.permute.xlu0 %786
        %788 = vrot.lane.b32.xlu0 %v781, 127
        %v789 = vpop.permute.xlu0 %788
        %v790 = vmul.f32 %v783, 0.9248864
        %v791 = vadd.f32 %v790, 0.0
        %v792 = vmul.f32 %v780, 0.8761586
        %v793 = vadd.f32 %v791, %v792
        %v794 = vmul.f32 %v787, 0.9248864
        %v795 = vadd.f32 %v793, %v794
        %v796 = vmul.f32 %v783, 0.8761586
        %v797 = vmul.f32 %v785, 0.8761586
        %v800 = vrot.slane %v796, 1
        %v801 = vrot.slane %v797, 1
        %v802 = vsel %vm222, %v800, %v801
        %v804 = vadd.f32 %v795, %v802
        %v805 = vmul.f32 %v780, 0.79582006
        %v806 = vmul.f32 %v781, 0.79582006
        %v809 = vrot.slane %v805, 1
        %v810 = vrot.slane %v806, 1
        %v811 = vsel %vm222, %v809, %v810
        %v813 = vadd.f32 %v804, %v811
        %v814 = vmul.f32 %v787, 0.8761586
        %v815 = vmul.f32 %v789, 0.8761586
        %v818 = vrot.slane %v814, 1
        %v819 = vrot.slane %v815, 1
        %v820 = vsel %vm222, %v818, %v819
        %v822 = vadd.f32 %v813, %v820
        %v823 = vmul.f32 %v785, 0.9248864
        %v826 = vrot.slane %v790, 2
        %v827 = vrot.slane %v823, 2
        %v828 = vsel %vm278, %v826, %v827
        %v830 = vadd.f32 %v822, %v828
        %v831 = vmul.f32 %v781, 0.8761586
        %v834 = vrot.slane %v792, 2
        %v835 = vrot.slane %v831, 2
        %v836 = vsel %vm278, %v834, %v835
        %v838 = vadd.f32 %v830, %v836
        %v839 = vmul.f32 %v789, 0.9248864
        %v842 = vrot.slane %v794, 2
        %v843 = vrot.slane %v839, 2
        %v844 = vsel %vm278, %v842, %v843
        %v846 = vadd.f32 %v838, %v844
        %vm847 = vcmp.lt.f32.partialorder %v846, %v748
        %v848 = vsel %vm847, %v846, %v748
        %v849 = vrot.slane %v213, 2
        %v850 = vrot.slane %v215, 2
        %v851 = vsel %vm278, %v849, %v850
        %v852 = vsel %vm847, %v851, %v752
        %v853 = vsel %vm847, %v748, %v846
        %v854 = vsel %vm847, %v752, %v851
        %vm855 = vcmp.lt.f32.partialorder %v853, %v756
        %v856 = vsel %vm855, %v853, %v756
        %v857 = vsel %vm855, %v854, %v757
        %v858 = vsel %vm855, %v756, %v853
        %v859 = vsel %vm855, %v757, %v854
        %vm860 = vcmp.lt.f32.partialorder %v858, %v761
        %v861 = vsel %vm860, %v858, %v761
        %v862 = vsel %vm860, %v859, %v762
        %v863 = vsub.f32 %v185, %v764
        %v864 = vsub.f32 %v186, %v766
        %v865 = vand.u32 2147483647, %v863
        %v866 = vand.u32 2147483647, %v864
        %v869 = vrot.slane %v865, 2
        %v870 = vrot.slane %v866, 2
        %v871 = vsel %vm278, %v869, %v870
        %v874 = vsel %vm202, %v871, 0.0
        %v875 = vsel %vm203, %v870, 0.0
        %876 = vrot.lane.b32.xlu0 %v874, 1
        %v877 = vpop.permute.xlu0 %876
        %878 = vrot.lane.b32.xlu0 %v875, 1
        %v879 = vpop.permute.xlu0 %878
        %880 = vrot.lane.b32.xlu0 %v874, 127
        %v881 = vpop.permute.xlu0 %880
        %882 = vrot.lane.b32.xlu0 %v875, 127
        %v883 = vpop.permute.xlu0 %882
        %v884 = vmul.f32 %v877, 0.9248864
        %v885 = vadd.f32 %v884, 0.0
        %v886 = vmul.f32 %v874, 0.8761586
        %v887 = vadd.f32 %v885, %v886
        %v888 = vmul.f32 %v881, 0.9248864
        %v889 = vadd.f32 %v887, %v888
        %v890 = vmul.f32 %v877, 0.8761586
        %v891 = vmul.f32 %v879, 0.8761586
        %v894 = vrot.slane %v890, 1
        %v895 = vrot.slane %v891, 1
        %v896 = vsel %vm222, %v894, %v895
        %v898 = vadd.f32 %v889, %v896
        %v899 = vmul.f32 %v874, 0.79582006
        %v900 = vmul.f32 %v875, 0.79582006
        %v903 = vrot.slane %v899, 1
        %v904 = vrot.slane %v900, 1
        %v905 = vsel %vm222, %v903, %v904
        %v907 = vadd.f32 %v898, %v905
        %v908 = vmul.f32 %v881, 0.8761586
        %v909 = vmul.f32 %v883, 0.8761586
        %v912 = vrot.slane %v908, 1
        %v913 = vrot.slane %v909, 1
        %v914 = vsel %vm222, %v912, %v913
        %v916 = vadd.f32 %v907, %v914
        %v917 = vmul.f32 %v879, 0.9248864
        %v920 = vrot.slane %v884, 2
        %v921 = vrot.slane %v917, 2
        %v922 = vsel %vm278, %v920, %v921
        %v924 = vadd.f32 %v916, %v922
        %v925 = vmul.f32 %v875, 0.8761586
        %v928 = vrot.slane %v886, 2
        %v929 = vrot.slane %v925, 2
        %v930 = vsel %vm278, %v928, %v929
        %v932 = vadd.f32 %v924, %v930
        %v933 = vmul.f32 %v883, 0.9248864
        %v936 = vrot.slane %v888, 2
        %v937 = vrot.slane %v933, 2
        %v938 = vsel %vm278, %v936, %v937
        %v940 = vadd.f32 %v932, %v938
        %vm941 = vcmp.lt.f32.partialorder %v940, %v848
        %v942 = vsel %vm941, %v940, %v848
        %v943 = vrot.slane %v181, 2
        %v944 = vrot.slane %v182, 2
        %v945 = vsel %vm278, %v943, %v944
        %v946 = vsel %vm941, %v945, %v852
        %v947 = vsel %vm941, %v848, %v940
        %v948 = vsel %vm941, %v852, %v945
        %vm949 = vcmp.lt.f32.partialorder %v947, %v856
        %v950 = vsel %vm949, %v947, %v856
        %v951 = vsel %vm949, %v948, %v857
        %v952 = vsel %vm949, %v856, %v947
        %v953 = vsel %vm949, %v857, %v948
        %vm954 = vcmp.lt.f32.partialorder %v952, %v861
        %v955 = vsel %vm954, %v952, %v861
        %v956 = vsel %vm954, %v953, %v862
        %v957 = vsub.f32 %v209, %v764
        %v958 = vsub.f32 %v211, %v766
        %v959 = vand.u32 2147483647, %v957
        %v960 = vand.u32 2147483647, %v958
        %v963 = vrot.slane %v959, 2
        %v964 = vrot.slane %v960, 2
        %v965 = vsel %vm278, %v963, %v964
        %v968 = vsel %vm202, %v965, 0.0
        %v969 = vsel %vm203, %v964, 0.0
        %970 = vrot.lane.b32.xlu0 %v968, 1
        %v971 = vpop.permute.xlu0 %970
        %972 = vrot.lane.b32.xlu0 %v969, 1
        %v973 = vpop.permute.xlu0 %972
        %974 = vrot.lane.b32.xlu0 %v968, 127
        %v975 = vpop.permute.xlu0 %974
        %976 = vrot.lane.b32.xlu0 %v969, 127
        %v977 = vpop.permute.xlu0 %976
        %v978 = vmul.f32 %v971, 0.9248864
        %v979 = vadd.f32 %v978, 0.0
        %v980 = vmul.f32 %v968, 0.8761586
        %v981 = vadd.f32 %v979, %v980
        %v982 = vmul.f32 %v975, 0.9248864
        %v983 = vadd.f32 %v981, %v982
        %v984 = vmul.f32 %v971, 0.8761586
        %v985 = vmul.f32 %v973, 0.8761586
        %v988 = vrot.slane %v984, 1
        %v989 = vrot.slane %v985, 1
        %v990 = vsel %vm222, %v988, %v989
        %v992 = vadd.f32 %v983, %v990
        %v993 = vmul.f32 %v968, 0.79582006
        %v994 = vmul.f32 %v969, 0.79582006
        %v997 = vrot.slane %v993, 1
        %v998 = vrot.slane %v994, 1
        %v999 = vsel %vm222, %v997, %v998
        %v1001 = vadd.f32 %v992, %v999
        %v1002 = vmul.f32 %v975, 0.8761586
        %v1003 = vmul.f32 %v977, 0.8761586
        %v1006 = vrot.slane %v1002, 1
        %v1007 = vrot.slane %v1003, 1
        %v1008 = vsel %vm222, %v1006, %v1007
        %v1010 = vadd.f32 %v1001, %v1008
        %v1011 = vmul.f32 %v973, 0.9248864
        %v1014 = vrot.slane %v978, 2
        %v1015 = vrot.slane %v1011, 2
        %v1016 = vsel %vm278, %v1014, %v1015
        %v1018 = vadd.f32 %v1010, %v1016
        %v1019 = vmul.f32 %v969, 0.8761586
        %v1022 = vrot.slane %v980, 2
        %v1023 = vrot.slane %v1019, 2
        %v1024 = vsel %vm278, %v1022, %v1023
        %v1026 = vadd.f32 %v1018, %v1024
        %v1027 = vmul.f32 %v977, 0.9248864
        %v1030 = vrot.slane %v982, 2
        %v1031 = vrot.slane %v1027, 2
        %v1032 = vsel %vm278, %v1030, %v1031
        %v1034 = vadd.f32 %v1026, %v1032
        %vm1035 = vcmp.lt.f32.partialorder %v1034, %v942
        %v1036 = vsel %vm1035, %v1034, %v942
        %v1037 = vrot.slane %v217, 2
        %v1038 = vrot.slane %v219, 2
        %v1039 = vsel %vm278, %v1037, %v1038
        %v1040 = vsel %vm1035, %v1039, %v946
        %v1041 = vsel %vm1035, %v942, %v1034
        %v1042 = vsel %vm1035, %v946, %v1039
        %vm1043 = vcmp.lt.f32.partialorder %v1041, %v950
        %v1044 = vsel %vm1043, %v1041, %v950
        %v1045 = vsel %vm1043, %v1042, %v951
        %v1046 = vsel %vm1043, %v950, %v1041
        %v1047 = vsel %vm1043, %v951, %v1042
        %vm1048 = vcmp.lt.f32.partialorder %v1046, %v955
        %v1049 = vsel %vm1048, %v1046, %v955
        %v1050 = vsel %vm1048, %v1047, %v956
        %vm1051 = vcmp.gt.f32.partialorder %v1036, 1.0
        %v1052 = vsel %vm1051, 5, %v1040
        %vm1053 = vcmp.gt.f32.partialorder %v1044, 1.0
        %v1054 = vsel %vm1053, 5, %v1045
        %vm1055 = vcmp.gt.f32.partialorder %v1049, 1.0
        %v1056 = vsel %vm1055, 5, %v1050
        %vm1057 = vcmp.eq.s32.totalorder %v1052, %v1054
        %v1058 = vsel %vm1057, 1, 0
        %vm1059 = vcmp.eq.s32.totalorder %v1052, %v1056
        %v1060 = vsel %vm1059, 1, 0
        %vm1061 = vcmp.eq.s32.totalorder %v1054, %v1056
        %v1062 = vsel %vm1061, 1, 0
        %v1063 = vadd.s32 %v1058, 1
        %v1064 = vadd.s32 %v1063, %v1060
        %vm1065 = vcmp.eq.s32.totalorder %v1052, 5
        %v1066 = vmul.u32 %v1064, 6
        %v1067 = vsub.s32 %v1066, %v1052
        %v1068 = vsel %vm1065, 4294967295, %v1067
        %vm1069 = vcmp.gt.s32.totalorder %v1068, 4294967295
        %v1070 = vsel %vm1069, %v1052, 0
        %v1071 = vsel %vm1069, %v1068, 4294967295
        %v1072 = vadd.s32 %v1063, %v1062
        %vm1073 = vcmp.eq.s32.totalorder %v1054, 5
        %v1074 = vmul.u32 %v1072, 6
        %v1075 = vsub.s32 %v1074, %v1054
        %v1076 = vsel %vm1073, 4294967295, %v1075
        %vm1077 = vcmp.gt.s32.totalorder %v1076, %v1071
        %v1078 = vsel %vm1077, %v1054, %v1070
        %v1079 = vsel %vm1077, %v1076, %v1071
        %v1080 = vadd.s32 %v1060, 1
        %v1081 = vadd.s32 %v1080, %v1062
        %vm1082 = vcmp.eq.s32.totalorder %v1056, 5
        %v1083 = vmul.u32 %v1081, 6
        %v1084 = vsub.s32 %v1083, %v1056
        %v1085 = vsel %vm1082, 4294967295, %v1084
        %vm1086 = vcmp.gt.s32.totalorder %v1085, %v1079
        %v1087 = vsel %vm1086, %v1056, %v1078
        %1088 = vst [vmem:[%s165] sm:$0xff] %v1087
        %s1089 = sand.u32 %s90, 1
        %s1090 = scalar_lea.sflag [#allocation3], %s1089
        %s1091 = sand.u32 %s90, 1
        %s1092 = smul.addr %s1091, 8
        %s1093 = scalar_lea.vmem [#allocation2], %s1092
        // Predicated region
        $region29: #{tpu_custom_call.1} parent=27 // pred_check
          %p1094 = pneg %p100
        $region30: #{tpu_custom_call.1} parent=27 // pred_check_branch
          %1096 = sbr.rel (%p1094) target = $region32
        $region31: #{tpu_custom_call.1} parent=27 // pred_region
          %s1098 = ssub.s32 128, 128
          %1099 = vsyncadd %s1090, %s1098
          %s1100 = smul.addr %s20, 2
          %s1101 = sadd.s32 %s21, %s1100
          %s1102 = smul.addr %s1101, 128
          %s1103 = scalar_lea.hbm %s2, %s1102
          %s1105 = sshll.u32 %s1093, 4
          %s1106 = int_to_ptr.vmem [resolvable:$true] %s1105
          %1108 = dma.vmem_to_hbm [thread:$0]  %s1106, 128, %s1103, %s1090
        $region32: #{tpu_custom_call.1} parent=27 // pred_fallthru
          _
      $region28: #{tpu_custom_call.1} parent=5 // pred_fallthru
        _
      %p1109 = scmp.le.s32.totalorder 2, %s11
      // Predicated region
      $region33: #{tpu_custom_call.1} parent=5 // pred_check
        %p1110 = pneg %p1109
      $region34: #{tpu_custom_call.1} parent=5 // pred_check_branch
        %1112 = sbr.rel (%p1110) target = $region36
      $region35: #{tpu_custom_call.1} parent=5 // pred_region
        %s1113 = ssub.s32 %s11, 2
        // Predicated region
        $region37: #{tpu_custom_call.1} parent=35 // pred_check
          %p1114 = pneg %p106
        $region38: #{tpu_custom_call.1} parent=35 // pred_check_branch
          %1116 = sbr.rel (%p1114) target = $region40
        $region39: #{tpu_custom_call.1} parent=35 // pred_region
          %s1117 = sand.u32 %s91, 1
          %s1118 = scalar_lea.sflag [#allocation3], %s1117
          %s1119 = sand.u32 %s91, 1
          %s1120 = smul.addr %s1119, 8
          %s1121 = scalar_lea.vmem [#allocation2], %s1120
          %1122 = dma.done %s1118, 128
        $region40: #{tpu_custom_call.1} parent=35 // pred_fallthru
          _
      $region36: #{tpu_custom_call.1} parent=5 // pred_fallthru
        _
    $region6: #{tpu_custom_call.1} parent=1 // loop_footer
      %s15 = sadd.s32 1, %s11
    $region7: #{tpu_custom_call.1} parent=1 // loop_footer_branch
      %10 = sbr.rel target = $region3
    $region8: #{tpu_custom_call.1} parent=1 // loop_exit
      _
    %1123 = vsyncpa [#allocation3], 1
    %s1124 = scalar_lea.sflag [#allocation3], 1
    %1125 = vsyncpa %s1124, 1

</llo_original>
